<compile_context>
chip_gen: v7x
topology: tpu7x:2x2x1
jax: 0.10.0
libtpu: 0.0.40
codegen_flags: <defaults>
</compile_context>

<pallas_src>
import jax
import jax.numpy as jnp
from jax import lax
from jax.experimental import pallas as pl
from jax.experimental.pallas import tpu as pltpu


def _round_up(v, m):
    return ((v + m - 1) // m) * m


def _default_tm_max():
    # v6e / v7x: 32 MiB default scoped VMEM -> tm up to 1024 is safe.
    # v5e (16 MiB scoped default) and unknown chips: stay at 512.
    try:
        kind = jax.devices()[0].device_kind.lower()
    except Exception:
        return 512
    if ("v6" in kind) or ("v7" in kind) or ("7x" in kind):
        return 1024
    return 512


def fold_conv_bn(weight, gamma, beta, running_mean, running_var, eps=1e-5):
    """Fold inference-mode BN into the 1x1 conv. Call ONCE, reuse the result."""
    Cout, Cin = weight.shape[0], weight.shape[1]
    scale = gamma.astype(jnp.float32) * lax.rsqrt(
        running_var.astype(jnp.float32) + jnp.float32(eps))            # [Cout]
    bias = (beta.astype(jnp.float32)
            - running_mean.astype(jnp.float32) * scale).reshape(Cout, 1)
    w_folded = (weight.reshape(Cout, Cin).astype(jnp.float32)
                * scale[:, None]).astype(jnp.bfloat16)                 # [Cout, Cin]
    return w_folded, bias


def _conv_bn_relu_kernel(x_ref, w_ref, b_ref, o_ref, acc_ref):
    # x_ref: [1, tk, tm] (f32 or bf16), w_ref: [Cout, tk] bf16 (BN folded),
    # b_ref: [Cout, 1] f32, o_ref: [1, Cout, tm], acc_ref: [Cout, tm] f32.
    k = pl.program_id(2)

    @pl.when(k == 0)
    def _init():
        acc_ref[...] = jnp.zeros_like(acc_ref)

    x = x_ref[0]
    if x.dtype != jnp.bfloat16:          # in-kernel cast only for f32 callers
        x = x.astype(jnp.bfloat16)
    acc_ref[...] += jnp.dot(w_ref[...], x, preferred_element_type=jnp.float32)

    @pl.when(k == pl.num_programs(2) - 1)
    def _finalize():
        y = acc_ref[...] + b_ref[...]
        o_ref[0] = jnp.maximum(y, 0.0).astype(o_ref.dtype)


def conv2d_bn_relu_folded(x_nchw, w_folded, bias, *, out_dtype=None, tm_max=None):
    """x_nchw: [N, Cin, H, W]; w_folded: [Cout, Cin] bf16; bias: [Cout, 1] f32.
    Returns relu(BN(conv1x1(x))) as [N, Cout, H, W] in `out_dtype` (default x dtype)."""
    N, Cin, H, W = x_nchw.shape
    Cout = w_folded.shape[0]
    M = H * W
    out_dtype = x_nchw.dtype if out_dtype is None else out_dtype

    # Free reshape on the native NCHW layout (no transpose / pad copy).
    x = x_nchw.reshape(N, Cin, M)

    if M < 128:
        # Degenerate spatial case (the module's actual 1x1 input): a masked
        # single-lane matvec; kernel-launch + pipeline overhead dominates, so
        # let XLA's fused matvec handle it (same folded-bf16 numerics).
        y = jnp.einsum("oc,ncm->nom", w_folded, x.astype(jnp.bfloat16),
                       preferred_element_type=jnp.float32)
        y = jnp.maximum(y + bias[None], 0.0)
        return y.astype(out_dtype).reshape(N, Cout, H, W)

    # ---- Tile selection -----------------------------------------------------
    if tm_max is None:
        tm_max = _default_tm_max()
    # Lane (last-dim) tile: multiple of 128, aim for >=2 tiles so both v7x
    # TensorCores get work (also gives intra-core pipelining on v5e/v6e).
    tm = min(tm_max, _round_up(pl.cdiv(M, 2), 128))
    # Reduction (Cin) tile: must divide Cin exactly (no ragged accumulation).
    tk = Cin
    for cand in (512, 256, 128):
        if Cin % cand == 0:
            tk = cand
            break

    grid = (N, pl.cdiv(M, tm), Cin // tk)

    cost = pl.CostEstimate(
        flops=2 * N * Cout * Cin * M,
        transcendentals=0,
        bytes_accessed=(x.size * x.dtype.itemsize
                        + w_folded.size * w_folded.dtype.itemsize
                        + bias.size * bias.dtype.itemsize
                        + N * Cout * M * jnp.dtype(out_dtype).itemsize))

    out = pl.pallas_call(
        _conv_bn_relu_kernel,
        out_shape=jax.ShapeDtypeStruct((N, Cout, M), out_dtype),
        grid=grid,
        in_specs=[
            pl.BlockSpec((1, tk, tm), lambda n, j, k: (n, k, j)),  # activations
            pl.BlockSpec((Cout, tk), lambda n, j, k: (0, k)),      # folded weights
            pl.BlockSpec((Cout, 1), lambda n, j, k: (0, 0)),       # folded bias (resident)
        ],
        out_specs=pl.BlockSpec((1, Cout, tm), lambda n, j, k: (n, 0, j)),
        scratch_shapes=[pltpu.VMEM((Cout, tm), jnp.float32)],       # f32 accumulator
        compiler_params=pltpu.CompilerParams(
            dimension_semantics=("parallel", "parallel", "arbitrary")),
        cost_estimate=cost,
    )(x, w_folded, bias)

    return out.reshape(N, Cout, H, W)


if __name__ == "__main__":
    key = jax.random.PRNGKey(0)
    kx, kw, kg, kb, km, kv = jax.random.split(key, 6)

    N, Cin, H, W, Cout = 1, 2048, 1, 1, 256

    weight = jax.random.normal(kw, (Cout, Cin, 1, 1), dtype=jnp.float32) * 0.02
    gamma = 1.0 + 0.1 * jax.random.normal(kg, (Cout,), dtype=jnp.float32)
    beta = 0.1 * jax.random.normal(kb, (Cout,), dtype=jnp.float32)
    running_mean = 0.1 * jax.random.normal(km, (Cout,), dtype=jnp.float32)
    running_var = jax.random.uniform(kv, (Cout,), dtype=jnp.float32,
                                     minval=0.5, maxval=1.5)

    # Fold BN ONCE (hoisted out of the per-call path) and reuse everywhere.
    w_folded, bias = fold_conv_bn(weight, gamma, beta, running_mean, running_var,
                                  eps=1e-5)
    w_folded = jax.block_until_ready(w_folded)
    bias = jax.block_until_ready(bias)

    def reference(xin):
        w2 = weight.reshape(Cout, Cin)
        y = jnp.einsum("nchw,oc->nohw", xin, w2)
        inv = 1.0 / jnp.sqrt(running_var + 1e-5)
        y = ((y - running_mean[None, :, None, None])
             * (inv * gamma)[None, :, None, None]
             + beta[None, :, None, None])
        return jnp.maximum(y, 0.0)

    # 1) Module's actual shape [1, 2048, 1, 1] (degenerate spatial -> jnp path).
    x = jax.random.normal(kx, (N, Cin, H, W), dtype=jnp.float32)
    out = jax.block_until_ready(conv2d_bn_relu_folded(x, w_folded, bias))
    assert out.shape == (N, Cout, H, W), out.shape
    assert jnp.allclose(out, reference(x), rtol=3e-2, atol=3e-2)

    # 2) Spatial sizes that exercise the Pallas kernel (even tiles + ragged tail).
    for (h2, w2) in ((16, 16), (30, 30)):
        x2 = jax.random.normal(kx, (1, Cin, h2, w2), dtype=jnp.float32)
        o2 = jax.block_until_ready(conv2d_bn_relu_folded(x2, w_folded, bias))
        assert o2.shape == (1, Cout, h2, w2), o2.shape
        assert jnp.allclose(o2, reference(x2), rtol=3e-2, atol=3e-2)

    # 3) bf16 activations in / bf16 out (halved HBM traffic path).
    x3 = jax.random.normal(kx, (1, Cin, 16, 16), dtype=jnp.bfloat16)
    o3 = jax.block_until_ready(
        conv2d_bn_relu_folded(x3, w_folded, bias, out_dtype=jnp.bfloat16))
    assert o3.shape == (1, Cout, 16, 16) and o3.dtype == jnp.bfloat16
    assert jnp.allclose(o3.astype(jnp.float32),
                        reference(x3.astype(jnp.float32)),
                        rtol=6e-2, atol=6e-2)

    print("KERNEL_OK")
</pallas_src>

<mosaic_0001>
module attributes {stable_mosaic.version = 11 : i64} {
  func.func @_conv_bn_relu_kernel(%arg0: i32, %arg1: i32, %arg2: i32, %arg3: memref<1x512x128xf32, #tpu.memory_space<vmem>>, %arg4: memref<256x512xbf16, #tpu.memory_space<vmem>>, %arg5: memref<256x1xf32, #tpu.memory_space<vmem>>, %arg6: memref<1x256x128xf32, #tpu.memory_space<vmem>>, %arg7: memref<256x128xf32, #tpu.memory_space<vmem>>) attributes {dimension_semantics = [#tpu.dimension_semantics<parallel>, #tpu.dimension_semantics<parallel>, #tpu.dimension_semantics<arbitrary>], iteration_bounds = array<i64: 1, 2, 4>, scalar_prefetch = 0 : i64, scratch_operands = 1 : i64, tpu.core_type = #tpu.core_type<tc>, window_params = [{transform_indices = @transform_0, window_bounds = array<i64: 1, 512, 128>}, {transform_indices = @transform_1, window_bounds = array<i64: 256, 512>}, {pipeline_mode = #tpu.pipeline_mode<synchronous>, transform_indices = @transform_2, window_bounds = array<i64: 256, 1>}, {transform_indices = @transform_3, window_bounds = array<i64: 1, 256, 128>}]} {
    %c0_i32 = arith.constant 0 : i32
    %0 = arith.cmpi eq, %arg2, %c0_i32 : i32
    %1 = arith.extui %0 : i1 to i32
    %c0_i32_0 = arith.constant 0 : i32
    %2 = arith.cmpi ne, %1, %c0_i32_0 : i32
    scf.if %2 {
      %cst_10 = arith.constant 0.000000e+00 : f32
      %14 = vector.broadcast %cst_10 : f32 to vector<256x128xf32>
      %c0_11 = arith.constant 0 : index
      %c0_12 = arith.constant 0 : index
      %15 = vector.load %arg7[%c0_11, %c0_12] : memref<256x128xf32, #tpu.memory_space<vmem>>, vector<256x128xf32>
      tpu.vector_store %arg7[%c0_11, %c0_12], %14 {strides = array<i32>} : memref<256x128xf32, #tpu.memory_space<vmem>>, vector<256x128xf32>,
    } else {
    }
    %c0 = arith.constant 0 : index
    %c0_1 = arith.constant 0 : index
    %c0_2 = arith.constant 0 : index
    %3 = vector.load %arg3[%c0, %c0_1, %c0_2] : memref<1x512x128xf32, #tpu.memory_space<vmem>>, vector<1x512x128xf32>
    %4 = vector.shape_cast %3 : vector<1x512x128xf32> to vector<512x128xf32>
    %5 = arith.truncf %4 : vector<512x128xf32> to vector<512x128xbf16>
    %c0_3 = arith.constant 0 : index
    %c0_4 = arith.constant 0 : index
    %6 = vector.load %arg7[%c0_3, %c0_4] : memref<256x128xf32, #tpu.memory_space<vmem>>, vector<256x128xf32>
    %c0_5 = arith.constant 0 : index
    %c0_6 = arith.constant 0 : index
    %7 = vector.load %arg4[%c0_5, %c0_6] : memref<256x512xbf16, #tpu.memory_space<vmem>>, vector<256x512xbf16>
    %cst = arith.constant dense<0.000000e+00> : vector<256x128xf32>
    %8 = tpu.matmul %7, %5, %cst {dimension_numbers = #tpu.dot_dimension_numbers<[1], [0], [0], [1], [0, 0, 1, 1], [], []>} : vector<256x512xbf16>, vector<512x128xbf16>, vector<256x128xf32> -> vector<256x128xf32>
    %9 = arith.addf %6, %8 : vector<256x128xf32>
    %c0_7 = arith.constant 0 : index
    %c0_8 = arith.constant 0 : index
    %10 = vector.load %arg7[%c0_7, %c0_8] : memref<256x128xf32, #tpu.memory_space<vmem>>, vector<256x128xf32>
    tpu.vector_store %arg7[%c0_7, %c0_8], %9 {strides = array<i32>} : memref<256x128xf32, #tpu.memory_space<vmem>>, vector<256x128xf32>,
    %c3_i32 = arith.constant 3 : i32
    %11 = arith.cmpi eq, %arg2, %c3_i32 : i32
    %12 = arith.extui %11 : i1 to i32
    %c0_i32_9 = arith.constant 0 : i32
    %13 = arith.cmpi ne, %12, %c0_i32_9 : i32
    scf.if %13 {
      %c0_10 = arith.constant 0 : index
      %c0_11 = arith.constant 0 : index
      %14 = vector.load %arg7[%c0_10, %c0_11] : memref<256x128xf32, #tpu.memory_space<vmem>>, vector<256x128xf32>
      %c0_12 = arith.constant 0 : index
      %c0_13 = arith.constant 0 : index
      %15 = vector.load %arg5[%c0_12, %c0_13] : memref<256x1xf32, #tpu.memory_space<vmem>>, vector<256x1xf32>
      %16 = vector.broadcast %15 : vector<256x1xf32> to vector<256x128xf32>
      %17 = arith.addf %14, %16 : vector<256x128xf32>
      %cst_14 = arith.constant 0.000000e+00 : f32
      %18 = vector.broadcast %cst_14 : f32 to vector<256x128xf32>
      %19 = arith.maximumf %17, %18 : vector<256x128xf32>
      %c0_15 = arith.constant 0 : index
      %c0_16 = arith.constant 0 : index
      %c0_17 = arith.constant 0 : index
      %20 = vector.load %arg6[%c0_15, %c0_16, %c0_17] : memref<1x256x128xf32, #tpu.memory_space<vmem>>, vector<1x256x128xf32>
      %21 = vector.shape_cast %20 : vector<1x256x128xf32> to vector<256x128xf32>
      %22 = vector.shape_cast %19 : vector<256x128xf32> to vector<1x256x128xf32>
      tpu.vector_store %arg6[%c0_15, %c0_16, %c0_17], %22 {strides = array<i32>} : memref<1x256x128xf32, #tpu.memory_space<vmem>>, vector<1x256x128xf32>,
    } else {
    }
    return
  }
  func.func @transform_0(%arg0: i32, %arg1: i32, %arg2: i32) -> (i32, i32, i32) {
    %c0_i32 = arith.constant 0 : i32
    return %arg0, %arg2, %arg1 : i32, i32, i32
  }
  func.func @transform_1(%arg0: i32, %arg1: i32, %arg2: i32) -> (i32, i32) {
    %c0_i32 = arith.constant 0 : i32
    %c0_i32_0 = arith.constant 0 : i32
    return %c0_i32, %arg2 : i32, i32
  }
  func.func @transform_2(%arg0: i32, %arg1: i32, %arg2: i32) -> (i32, i32) {
    %c0_i32 = arith.constant 0 : i32
    %c0_i32_0 = arith.constant 0 : i32
    %c0_i32_1 = arith.constant 0 : i32
    return %c0_i32, %c0_i32_0 : i32, i32
  }
  func.func @transform_3(%arg0: i32, %arg1: i32, %arg2: i32) -> (i32, i32, i32) {
    %c0_i32 = arith.constant 0 : i32
    %c0_i32_0 = arith.constant 0 : i32
    return %arg0, %c0_i32, %arg1 : i32, i32, i32
  }
}

</mosaic_0001>

<llo_original>
// kernel: tpu_custom_call.1
$region0: #{tpu_custom_call.1}
  #allocation0 [shape = 'u32[]', space=smem, size = 0x4, offset = 0x4, fixed_abs, tag = 'smem constant byte address 0x4 - core index']
  #allocation1 [shape = 'u32[144,128]{1,0:T(1,128)}', space=vmem, size = 0x12000, scoped, tag = 'internal scratch']
  #allocation2 [shape = 'f32[256,128]{1,0:T(8,128)}', space=vmem, size = 0x20000, scoped, tag = 'scratch operand']
  %s0 = inlined_call_operand.hbm [shape: f32[1,2048,256], index: 0, kind: input, shape index: {}]
  %s1 = inlined_call_operand.hbm [shape: bf16[256,2048], index: 1, kind: input, shape index: {}]
  %s2 = inlined_call_operand.vmem [shape: f32[256,1], index: 2, kind: input, shape index: {}]
  %s3 = inlined_call_operand.hbm [shape: f32[1,256,256], index: 3, kind: output, shape index: {}]
  %s4 = sld [smem:[#allocation0]]
  $region61: #{tpu_custom_call.1} parent=0
    _
  %s6 = ssub.s32 1, %s4
  %s7 = scalar_select 0, %s6, %s4
  $region1: #{tpu_custom_call.1} parent=0
    #allocation3 [shape = 'u8[524288]{0}', space=vmem, size = 0x80000, scoped, tag = 'input window, operand 0']
    #allocation4 [shape = 's32[2]{0}', space=sflag, size = 0x8, scoped, tag = 'scoped memory for tpu_custom_call.1']
    #allocation5 [shape = 's32[2]{0}', space=sflag, size = 0x8, scoped, tag = 'scoped memory for tpu_custom_call.1']
    #allocation6 [shape = 'u8[524288]{0}', space=vmem, size = 0x80000, scoped, tag = 'input window, operand 1']
    #allocation7 [shape = 's32[2]{0}', space=sflag, size = 0x8, scoped, tag = 'scoped memory for tpu_custom_call.1']
    #allocation8 [shape = 'u8[262144]{0}', space=vmem, size = 0x40000, scoped, tag = 'output window, operand 0']
    %8 = vsyncpa [#allocation4], 0
    %s9 = scalar_lea.sflag [#allocation4], 1
    %10 = vsyncpa %s9, 0
    %11 = vsyncpa [#allocation7], 0
    %s12 = scalar_lea.sflag [#allocation7], 1
    %13 = vsyncpa %s12, 0
    %14 = vsyncpa [#allocation5], 0
    %s15 = scalar_lea.sflag [#allocation5], 1
    %16 = vsyncpa %s15, 0
    loop: start=0, step=1, limit=10
    $region2: #{tpu_custom_call.1} parent=1 // loop_pre_header
      _
    $region3: #{tpu_custom_call.1} parent=1 // loop_header
      %s18 = sphi 0, %s22
      %p19 = scmp.ge.s32.totalorder %s18, 10
      %s25 = sphi 0, %s44
      %s26 = sphi 0, %s40
      %s27 = sphi 0, %s36
      %s28 = sphi 0, %s25
      %s29 = sphi 0, %s26
      %s30 = sphi 0, %s27
      %s31 = sphi 0, %s28
      %s32 = sphi 0, %s29
      %s33 = sphi 0, %s30
      %s51 = sphi 0, %s53
      %s54 = sphi 0, %s51
      %s55 = sphi 0, %s54
      %s71 = sphi 0, %s55
      %s77 = sphi 0, %s79
      %s80 = sphi 0, %s77
      %s81 = sphi 0, %s80
      %s97 = sphi 0, %s81
      %s101 = sphi 0, %s101
      %s103 = sphi 0, %s101
      %s104 = sphi 0, %s103
      %s118 = sphi 0, %s104
      %s126 = sphi 0, %s128
      %s129 = sphi 0, %s126
      %s130 = sphi 0, %s129
      %s146 = sphi 0, %s130
    $region4: #{tpu_custom_call.1} parent=1 // loop_header_branch
      %21 = sbr.rel (%p19) target = $region8
    $region5: #{tpu_custom_call.1} parent=1 // loop_body
      %s23 = ssub.s32 %s18, 1
      %s24 = ssub.s32 %s18, 2
      %s34 = sadd.s32 1, %s27
      %p35 = scmp.ge.s32.totalorder %s34, 4
      %s36 = scalar_select %p35, 0, %s34
      %s37 = sadd.s32 1, %s26
      %s38 = scalar_select %p35, %s37, %s26
      %p39 = scmp.ge.s32.totalorder %s38, 2
      %s40 = scalar_select %p39, 0, %s38
      %s41 = sadd.s32 1, %s25
      %s42 = scalar_select %p39, %s41, %s25
      %p43 = scmp.ge.s32.totalorder %s42, 1
      %s44 = scalar_select %p43, 0, %s42
      %s45 = ssub.s32 %s25, %s44
      %s46 = ssub.s32 %s27, %s36
      %s47 = sor.u32 %s45, %s46
      %s48 = ssub.s32 %s26, %s40
      %s49 = sor.u32 %s47, %s48
      %p50 = scmp.eq.s32.totalorder %s49, 0
      %s52 = sadd.s32 %s51, 1
      %s53 = scalar_select %p50, %s51, %s52
      %p56 = pneg %p50
      %p57 = scmp.eq.s32.totalorder %s18, 7
      %p58 = por %p56, %p57
      %p59 = scmp.ne.s32.totalorder %s51, %s54
      %p60 = scmp.eq.s32.totalorder %s18, 0
      %p61 = por %p59, %p60
      %p62 = scmp.ne.s32.totalorder %s51, %s54
      %p63 = scmp.eq.s32.totalorder %s23, 7
      %p64 = por %p62, %p63
      %p65 = scmp.ne.s32.totalorder %s54, %s55
      %p66 = scmp.eq.s32.totalorder %s23, 0
      %p67 = por %p65, %p66
      %p68 = scmp.ne.s32.totalorder %s54, %s55
      %p69 = scmp.eq.s32.totalorder %s24, 7
      %p70 = por %p68, %p69
      %p72 = scmp.ne.s32.totalorder %s55, %s71
      %p73 = scmp.eq.s32.totalorder %s24, 0
      %p74 = por %p72, %p73
      %s75 = ssub.s32 %s27, %s36
      %p76 = scmp.eq.s32.totalorder %s75, 0
      %s78 = sadd.s32 %s77, 1
      %s79 = scalar_select %p76, %s77, %s78
      %p82 = pneg %p76
      %p83 = scmp.eq.s32.totalorder %s18, 7
      %p84 = por %p82, %p83
      %p85 = scmp.ne.s32.totalorder %s77, %s80
      %p86 = scmp.eq.s32.totalorder %s18, 0
      %p87 = por %p85, %p86
      %p88 = scmp.ne.s32.totalorder %s77, %s80
      %p89 = scmp.eq.s32.totalorder %s23, 7
      %p90 = por %p88, %p89
      %p91 = scmp.ne.s32.totalorder %s80, %s81
      %p92 = scmp.eq.s32.totalorder %s23, 0
      %p93 = por %p91, %p92
      %p94 = scmp.ne.s32.totalorder %s80, %s81
      %p95 = scmp.eq.s32.totalorder %s24, 7
      %p96 = por %p94, %p95
      %p98 = scmp.ne.s32.totalorder %s81, %s97
      %p99 = scmp.eq.s32.totalorder %s24, 0
      %p100 = por %p98, %p99
      %s102 = sadd.s32 %s101, 1
      %p105 = scmp.eq.s32.totalorder %s18, 7
      %p106 = scmp.ne.s32.totalorder %s101, %s103
      %p107 = scmp.eq.s32.totalorder %s18, 0
      %p108 = por %p106, %p107
      %p109 = scmp.ne.s32.totalorder %s101, %s103
      %p110 = scmp.eq.s32.totalorder %s23, 7
      %p111 = por %p109, %p110
      %p112 = scmp.ne.s32.totalorder %s103, %s104
      %p113 = scmp.eq.s32.totalorder %s23, 0
      %p114 = por %p112, %p113
      %p115 = scmp.ne.s32.totalorder %s103, %s104
      %p116 = scmp.eq.s32.totalorder %s24, 7
      %p117 = por %p115, %p116
      %p119 = scmp.ne.s32.totalorder %s104, %s118
      %p120 = scmp.eq.s32.totalorder %s24, 0
      %p121 = por %p119, %p120
      %s122 = ssub.s32 %s25, %s44
      %s123 = ssub.s32 %s26, %s40
      %s124 = sor.u32 %s122, %s123
      %p125 = scmp.eq.s32.totalorder %s124, 0
      %s127 = sadd.s32 %s126, 1
      %s128 = scalar_select %p125, %s126, %s127
      %p131 = pneg %p125
      %p132 = scmp.eq.s32.totalorder %s18, 7
      %p133 = por %p131, %p132
      %p134 = scmp.ne.s32.totalorder %s126, %s129
      %p135 = scmp.eq.s32.totalorder %s18, 0
      %p136 = por %p134, %p135
      %p137 = scmp.ne.s32.totalorder %s126, %s129
      %p138 = scmp.eq.s32.totalorder %s23, 7
      %p139 = por %p137, %p138
      %p140 = scmp.ne.s32.totalorder %s129, %s130
      %p141 = scmp.eq.s32.totalorder %s23, 0
      %p142 = por %p140, %p141
      %p143 = scmp.ne.s32.totalorder %s129, %s130
      %p144 = scmp.eq.s32.totalorder %s24, 7
      %p145 = por %p143, %p144
      %p147 = scmp.ne.s32.totalorder %s130, %s146
      %p148 = scmp.eq.s32.totalorder %s24, 0
      %p149 = por %p147, %p148
      %p150 = scmp.le.s32.totalorder 1, %s18
      %p151 = scmp.lt.s32.totalorder %s18, 9
      %p152 = pnand %p150, %p151
      %p153 = pneg %p152
      // Predicated region
      $region9: #{tpu_custom_call.1} parent=5 // pred_check
        _
      $region10: #{tpu_custom_call.1} parent=5 // pred_check_branch
        %155 = sbr.rel (%p152) target = $region12
      $region11: #{tpu_custom_call.1} parent=5 // pred_region
        %s156 = ssub.s32 %s18, 1
        // Predicated region
        $region13: #{tpu_custom_call.1} parent=11 // pred_check
          %p157 = pneg %p114
        $region14: #{tpu_custom_call.1} parent=11 // pred_check_branch
          %159 = sbr.rel (%p157) target = $region16
        $region15: #{tpu_custom_call.1} parent=11 // pred_region
          _
        $region16: #{tpu_custom_call.1} parent=11 // pred_fallthru
          _
      $region12: #{tpu_custom_call.1} parent=5 // pred_fallthru
        _
      %p160 = scmp.lt.s32.totalorder %s18, 8
      // Predicated region
      $region17: #{tpu_custom_call.1} parent=5 // pred_check
        %p161 = pneg %p160
      $region18: #{tpu_custom_call.1} parent=5 // pred_check_branch
        %163 = sbr.rel (%p161) target = $region20
      $region19: #{tpu_custom_call.1} parent=5 // pred_region
        // Predicated region
        $region21: #{tpu_custom_call.1} parent=19 // pred_check
          %p164 = pneg %p61
        $region22: #{tpu_custom_call.1} parent=19 // pred_check_branch
          %166 = sbr.rel (%p164) target = $region24
        $region23: #{tpu_custom_call.1} parent=19 // pred_region
          %s167 = sand.u32 %s51, 1
          %s168 = scalar_lea.sflag [#allocation4], %s167
          %s169 = sand.u32 %s51, 1
          %s170 = smul.addr %s169, 512
          %s171 = scalar_lea.vmem [#allocation3], %s170
          %s172 = smul.u32 64, %s27
          %s174 = ssub.s32 8192, 8192
          %175 = vsyncadd %s168, %s174
          %s176 = smul.addr %s172, 2
          %s177 = sadd.s32 %s26, %s176
          %s178 = smul.addr %s25, 512
          %s179 = sadd.s32 %s177, %s178
          %s180 = smul.addr %s179, 128
          %s181 = scalar_lea.hbm %s0, %s180
          %s182 = sshll.u32 %s171, 4
          %s183 = int_to_ptr.vmem [resolvable:$true] %s182
          %188 = dma.hbm_to_vmem [thread:$0]  %s181, 8192, %s183, %s168, 256, 128, 8
        $region24: #{tpu_custom_call.1} parent=19 // pred_fallthru
          _
        // Predicated region
        $region25: #{tpu_custom_call.1} parent=19 // pred_check
          %p189 = pneg %p87
        $region26: #{tpu_custom_call.1} parent=19 // pred_check_branch
          %191 = sbr.rel (%p189) target = $region28
        $region27: #{tpu_custom_call.1} parent=19 // pred_region
          %s192 = sand.u32 %s77, 1
          %s193 = scalar_lea.sflag [#allocation7], %s192
          %s194 = sand.u32 %s77, 1
          %s195 = smul.addr %s194, 512
          %s196 = scalar_lea.vmem [#allocation6], %s195
          %s197 = smul.u32 4, %s27
          %s199 = ssub.s32 8192, 8192
          %200 = vsyncadd %s193, %s199
          %s201 = smul.addr %s197, 64
          %s202 = scalar_lea.hbm %s1, %s201
          %s203 = sshll.u32 %s196, 4
          %s204 = int_to_ptr.vmem [resolvable:$true] %s203
          %209 = dma.hbm_to_vmem [thread:$0]  %s202, 8192, %s204, %s193, 1024, 256, 16
        $region28: #{tpu_custom_call.1} parent=19 // pred_fallthru
          _
      $region20: #{tpu_custom_call.1} parent=5 // pred_fallthru
        _
      %p210 = scmp.le.s32.totalorder 1, %s18
      %p211 = scmp.lt.s32.totalorder %s18, 9
      %p212 = pnand %p210, %p211
      %p213 = pneg %p212
      // Predicated region
      $region29: #{tpu_custom_call.1} parent=5 // pred_check
        _
      $region30: #{tpu_custom_call.1} parent=5 // pred_check_branch
        %215 = sbr.rel (%p212) target = $region32
      $region31: #{tpu_custom_call.1} parent=5 // pred_region
        %s216 = ssub.s32 %s18, 1
        %s217 = sand.u32 %s54, 1
        %s218 = scalar_lea.sflag [#allocation4], %s217
        %s219 = sand.u32 %s54, 1
        %s220 = smul.addr %s219, 512
        %s221 = scalar_lea.vmem [#allocation3], %s220
        // Predicated region
        $region33: #{tpu_custom_call.1} parent=31 // pred_check
          %p222 = pneg %p67
        $region34: #{tpu_custom_call.1} parent=31 // pred_check_branch
          %224 = sbr.rel (%p222) target = $region36
        $region35: #{tpu_custom_call.1} parent=31 // pred_region
          %225 = dma.done %s218, 8192
        $region36: #{tpu_custom_call.1} parent=31 // pred_fallthru
          _
        %s226 = sand.u32 %s80, 1
        %s227 = scalar_lea.sflag [#allocation7], %s226
        %s228 = sand.u32 %s80, 1
        %s229 = smul.addr %s228, 512
        %s230 = scalar_lea.vmem [#allocation6], %s229
        // Predicated region
        $region37: #{tpu_custom_call.1} parent=31 // pred_check
          %p231 = pneg %p93
        $region38: #{tpu_custom_call.1} parent=31 // pred_check_branch
          %233 = sbr.rel (%p231) target = $region40
        $region39: #{tpu_custom_call.1} parent=31 // pred_region
          %234 = dma.done %s227, 8192
        $region40: #{tpu_custom_call.1} parent=31 // pred_fallthru
          _
        %s235 = sand.u32 %s54, 1
        %s236 = scalar_lea.sflag [#allocation4], %s235
        %s237 = sand.u32 %s54, 1
        %s238 = smul.addr %s237, 512
        %s239 = scalar_lea.vmem [#allocation3], %s238
        %p240 = pneg %p67
        %p241 = pneg %p64
        %s242 = sand.u32 %s80, 1
        %s243 = scalar_lea.sflag [#allocation7], %s242
        %s244 = sand.u32 %s80, 1
        %s245 = smul.addr %s244, 512
        %s246 = scalar_lea.vmem [#allocation6], %s245
        %p247 = pneg %p93
        %p248 = pneg %p90
        %p249 = pneg %p114
        %p250 = pneg %p111
        %p251 = pneg %p142
        %p252 = pneg %p139
        %s253 = sand.u32 %s129, 1
        %s254 = scalar_lea.sflag [#allocation5], %s253
        %s255 = sand.u32 %s129, 1
        %s256 = smul.addr %s255, 256
        %s257 = scalar_lea.vmem [#allocation8], %s256
        %s258 = smul.u32 64, %s30
        %s259 = smul.u32 4, %s30
        %p261 = scmp.eq.s32.totalorder %s30, 0
        // Predicated region
        $region41: #{tpu_custom_call.1} parent=31 // pred_check
          %p262 = pneg %p261
        $region42: #{tpu_custom_call.1} parent=31 // pred_check_branch
          %264 = sbr.rel (%p262) target = $region44
        $region43: #{tpu_custom_call.1} parent=31 // pred_region
          %265 = vst [vmem:[#allocation2] sm:$0xff] 0.0
          %266 = vst [vmem:[#allocation2 + $0x8] sm:$0xff] 0.0
          %267 = vst [vmem:[#allocation2 + $0x10] sm:$0xff] 0.0
          %268 = vst [vmem:[#allocation2 + $0x18] sm:$0xff] 0.0
          %269 = vst [vmem:[#allocation2 + $0x20] sm:$0xff] 0.0
          %270 = vst [vmem:[#allocation2 + $0x28] sm:$0xff] 0.0
          %271 = vst [vmem:[#allocation2 + $0x30] sm:$0xff] 0.0
          %272 = vst [vmem:[#allocation2 + $0x38] sm:$0xff] 0.0
          %273 = vst [vmem:[#allocation2 + $0x40] sm:$0xff] 0.0
          %274 = vst [vmem:[#allocation2 + $0x48] sm:$0xff] 0.0
          %275 = vst [vmem:[#allocation2 + $0x50] sm:$0xff] 0.0
          %276 = vst [vmem:[#allocation2 + $0x58] sm:$0xff] 0.0
          %277 = vst [vmem:[#allocation2 + $0x60] sm:$0xff] 0.0
          %278 = vst [vmem:[#allocation2 + $0x68] sm:$0xff] 0.0
          %279 = vst [vmem:[#allocation2 + $0x70] sm:$0xff] 0.0
          %280 = vst [vmem:[#allocation2 + $0x78] sm:$0xff] 0.0
          %281 = vst [vmem:[#allocation2 + $0x80] sm:$0xff] 0.0
          %282 = vst [vmem:[#allocation2 + $0x88] sm:$0xff] 0.0
          %283 = vst [vmem:[#allocation2 + $0x90] sm:$0xff] 0.0
          %284 = vst [vmem:[#allocation2 + $0x98] sm:$0xff] 0.0
          %285 = vst [vmem:[#allocation2 + $0xa0] sm:$0xff] 0.0
          %286 = vst [vmem:[#allocation2 + $0xa8] sm:$0xff] 0.0
          %287 = vst [vmem:[#allocation2 + $0xb0] sm:$0xff] 0.0
          %288 = vst [vmem:[#allocation2 + $0xb8] sm:$0xff] 0.0
          %289 = vst [vmem:[#allocation2 + $0xc0] sm:$0xff] 0.0
          %290 = vst [vmem:[#allocation2 + $0xc8] sm:$0xff] 0.0
          %291 = vst [vmem:[#allocation2 + $0xd0] sm:$0xff] 0.0
          %292 = vst [vmem:[#allocation2 + $0xd8] sm:$0xff] 0.0
          %293 = vst [vmem:[#allocation2 + $0xe0] sm:$0xff] 0.0
          %294 = vst [vmem:[#allocation2 + $0xe8] sm:$0xff] 0.0
          %295 = vst [vmem:[#allocation2 + $0xf0] sm:$0xff] 0.0
          %296 = vst [vmem:[#allocation2 + $0xf8] sm:$0xff] 0.0
        $region44: #{tpu_custom_call.1} parent=31 // pred_fallthru
          _
        %v297 = vld [vmem:[%s221] sm:$0xff]
        %v298 = vld [vmem:[%s221 + $0x8] sm:$0xff]
        %v299 = vld [vmem:[%s221 + $0x10] sm:$0xff]
        %v300 = vld [vmem:[%s221 + $0x18] sm:$0xff]
        %v301 = vld [vmem:[%s221 + $0x20] sm:$0xff]
        %v302 = vld [vmem:[%s221 + $0x28] sm:$0xff]
        %v303 = vld [vmem:[%s221 + $0x30] sm:$0xff]
        %v304 = vld [vmem:[%s221 + $0x38] sm:$0xff]
        %v305 = vld [vmem:[%s221 + $0x40] sm:$0xff]
        %v306 = vld [vmem:[%s221 + $0x48] sm:$0xff]
        %v307 = vld [vmem:[%s221 + $0x50] sm:$0xff]
        %v308 = vld [vmem:[%s221 + $0x58] sm:$0xff]
        %v309 = vld [vmem:[%s221 + $0x60] sm:$0xff]
        %v310 = vld [vmem:[%s221 + $0x68] sm:$0xff]
        %v311 = vld [vmem:[%s221 + $0x70] sm:$0xff]
        %v312 = vld [vmem:[%s221 + $0x78] sm:$0xff]
        %v313 = vld [vmem:[%s221 + $0x80] sm:$0xff]
        %v314 = vld [vmem:[%s221 + $0x88] sm:$0xff]
        %v315 = vld [vmem:[%s221 + $0x90] sm:$0xff]
        %v316 = vld [vmem:[%s221 + $0x98] sm:$0xff]
        %v317 = vld [vmem:[%s221 + $0xa0] sm:$0xff]
        %v318 = vld [vmem:[%s221 + $0xa8] sm:$0xff]
        %v319 = vld [vmem:[%s221 + $0xb0] sm:$0xff]
        %v320 = vld [vmem:[%s221 + $0xb8] sm:$0xff]
        %v321 = vld [vmem:[%s221 + $0xc0] sm:$0xff]
        %v322 = vld [vmem:[%s221 + $0xc8] sm:$0xff]
        %v323 = vld [vmem:[%s221 + $0xd0] sm:$0xff]
        %v324 = vld [vmem:[%s221 + $0xd8] sm:$0xff]
        %v325 = vld [vmem:[%s221 + $0xe0] sm:$0xff]
        %v326 = vld [vmem:[%s221 + $0xe8] sm:$0xff]
        %v327 = vld [vmem:[%s221 + $0xf0] sm:$0xff]
        %v328 = vld [vmem:[%s221 + $0xf8] sm:$0xff]
        %v329 = vld [vmem:[%s221 + $0x100] sm:$0xff]
        %v330 = vld [vmem:[%s221 + $0x108] sm:$0xff]
        %v331 = vld [vmem:[%s221 + $0x110] sm:$0xff]
        %v332 = vld [vmem:[%s221 + $0x118] sm:$0xff]
        %v333 = vld [vmem:[%s221 + $0x120] sm:$0xff]
        %v334 = vld [vmem:[%s221 + $0x128] sm:$0xff]
        %v335 = vld [vmem:[%s221 + $0x130] sm:$0xff]
        %v336 = vld [vmem:[%s221 + $0x138] sm:$0xff]
        %v337 = vld [vmem:[%s221 + $0x140] sm:$0xff]
        %v338 = vld [vmem:[%s221 + $0x148] sm:$0xff]
        %v339 = vld [vmem:[%s221 + $0x150] sm:$0xff]
        %v340 = vld [vmem:[%s221 + $0x158] sm:$0xff]
        %v341 = vld [vmem:[%s221 + $0x160] sm:$0xff]
        %v342 = vld [vmem:[%s221 + $0x168] sm:$0xff]
        %v343 = vld [vmem:[%s221 + $0x170] sm:$0xff]
        %v344 = vld [vmem:[%s221 + $0x178] sm:$0xff]
        %v345 = vld [vmem:[%s221 + $0x180] sm:$0xff]
        %v346 = vld [vmem:[%s221 + $0x188] sm:$0xff]
        %v347 = vld [vmem:[%s221 + $0x190] sm:$0xff]
        %v348 = vld [vmem:[%s221 + $0x198] sm:$0xff]
        %v349 = vld [vmem:[%s221 + $0x1a0] sm:$0xff]
        %v350 = vld [vmem:[%s221 + $0x1a8] sm:$0xff]
        %v351 = vld [vmem:[%s221 + $0x1b0] sm:$0xff]
        %v352 = vld [vmem:[%s221 + $0x1b8] sm:$0xff]
        %v353 = vld [vmem:[%s221 + $0x1c0] sm:$0xff]
        %v354 = vld [vmem:[%s221 + $0x1c8] sm:$0xff]
        %v355 = vld [vmem:[%s221 + $0x1d0] sm:$0xff]
        %v356 = vld [vmem:[%s221 + $0x1d8] sm:$0xff]
        %v357 = vld [vmem:[%s221 + $0x1e0] sm:$0xff]
        %v358 = vld [vmem:[%s221 + $0x1e8] sm:$0xff]
        %v359 = vld [vmem:[%s221 + $0x1f0] sm:$0xff]
        %v360 = vld [vmem:[%s221 + $0x1f8] sm:$0xff]
        %v361 = vpack.c.bf16 %v298, %v297
        %v362 = vpack.c.bf16 %v300, %v299
        %v363 = vpack.c.bf16 %v302, %v301
        %v364 = vpack.c.bf16 %v304, %v303
        %v365 = vpack.c.bf16 %v306, %v305
        %v366 = vpack.c.bf16 %v308, %v307
        %v367 = vpack.c.bf16 %v310, %v309
        %v368 = vpack.c.bf16 %v312, %v311
        %v369 = vpack.c.bf16 %v314, %v313
        %v370 = vpack.c.bf16 %v316, %v315
        %v371 = vpack.c.bf16 %v318, %v317
        %v372 = vpack.c.bf16 %v320, %v319
        %v373 = vpack.c.bf16 %v322, %v321
        %v374 = vpack.c.bf16 %v324, %v323
        %v375 = vpack.c.bf16 %v326, %v325
        %v376 = vpack.c.bf16 %v328, %v327
        %v377 = vpack.c.bf16 %v330, %v329
        %v378 = vpack.c.bf16 %v332, %v331
        %v379 = vpack.c.bf16 %v334, %v333
        %v380 = vpack.c.bf16 %v336, %v335
        %v381 = vpack.c.bf16 %v338, %v337
        %v382 = vpack.c.bf16 %v340, %v339
        %v383 = vpack.c.bf16 %v342, %v341
        %v384 = vpack.c.bf16 %v344, %v343
        %v385 = vpack.c.bf16 %v346, %v345
        %v386 = vpack.c.bf16 %v348, %v347
        %v387 = vpack.c.bf16 %v350, %v349
        %v388 = vpack.c.bf16 %v352, %v351
        %v389 = vpack.c.bf16 %v354, %v353
        %v390 = vpack.c.bf16 %v356, %v355
        %v391 = vpack.c.bf16 %v358, %v357
        %v392 = vpack.c.bf16 %v360, %v359
        %v393 = vld [vmem:[#allocation2] sm:$0xff]
        %v394 = vld [vmem:[#allocation2 + $0x8] sm:$0xff]
        %v395 = vld [vmem:[#allocation2 + $0x10] sm:$0xff]
        %v396 = vld [vmem:[#allocation2 + $0x18] sm:$0xff]
        %v397 = vld [vmem:[#allocation2 + $0x20] sm:$0xff]
        %v398 = vld [vmem:[#allocation2 + $0x28] sm:$0xff]
        %v399 = vld [vmem:[#allocation2 + $0x30] sm:$0xff]
        %v400 = vld [vmem:[#allocation2 + $0x38] sm:$0xff]
        %v401 = vld [vmem:[#allocation2 + $0x40] sm:$0xff]
        %v402 = vld [vmem:[#allocation2 + $0x48] sm:$0xff]
        %v403 = vld [vmem:[#allocation2 + $0x50] sm:$0xff]
        %v404 = vld [vmem:[#allocation2 + $0x58] sm:$0xff]
        %v405 = vld [vmem:[#allocation2 + $0x60] sm:$0xff]
        %v406 = vld [vmem:[#allocation2 + $0x68] sm:$0xff]
        %v407 = vld [vmem:[#allocation2 + $0x70] sm:$0xff]
        %v408 = vld [vmem:[#allocation2 + $0x78] sm:$0xff]
        %v409 = vld [vmem:[#allocation2 + $0x80] sm:$0xff]
        %v410 = vld [vmem:[#allocation2 + $0x88] sm:$0xff]
        %v411 = vld [vmem:[#allocation2 + $0x90] sm:$0xff]
        %v412 = vld [vmem:[#allocation2 + $0x98] sm:$0xff]
        %v413 = vld [vmem:[#allocation2 + $0xa0] sm:$0xff]
        %v414 = vld [vmem:[#allocation2 + $0xa8] sm:$0xff]
        %v415 = vld [vmem:[#allocation2 + $0xb0] sm:$0xff]
        %v416 = vld [vmem:[#allocation2 + $0xb8] sm:$0xff]
        %v417 = vld [vmem:[#allocation2 + $0xc0] sm:$0xff]
        %v418 = vld [vmem:[#allocation2 + $0xc8] sm:$0xff]
        %v419 = vld [vmem:[#allocation2 + $0xd0] sm:$0xff]
        %v420 = vld [vmem:[#allocation2 + $0xd8] sm:$0xff]
        %v421 = vld [vmem:[#allocation2 + $0xe0] sm:$0xff]
        %v422 = vld [vmem:[#allocation2 + $0xe8] sm:$0xff]
        %v423 = vld [vmem:[#allocation2 + $0xf0] sm:$0xff]
        %v424 = vld [vmem:[#allocation2 + $0xf8] sm:$0xff]
        %v425 = vld [vmem:[%s230] sm:$0xff]
        %v426 = vld [vmem:[%s230 + $0x8] sm:$0xff]
        %v427 = vld [vmem:[%s230 + $0x10] sm:$0xff]
        %v428 = vld [vmem:[%s230 + $0x18] sm:$0xff]
        %v429 = vld [vmem:[%s230 + $0x20] sm:$0xff]
        %v430 = vld [vmem:[%s230 + $0x28] sm:$0xff]
        %v431 = vld [vmem:[%s230 + $0x30] sm:$0xff]
        %v432 = vld [vmem:[%s230 + $0x38] sm:$0xff]
        %v433 = vld [vmem:[%s230 + $0x40] sm:$0xff]
        %v434 = vld [vmem:[%s230 + $0x48] sm:$0xff]
        %v435 = vld [vmem:[%s230 + $0x50] sm:$0xff]
        %v436 = vld [vmem:[%s230 + $0x58] sm:$0xff]
        %v437 = vld [vmem:[%s230 + $0x60] sm:$0xff]
        %v438 = vld [vmem:[%s230 + $0x68] sm:$0xff]
        %v439 = vld [vmem:[%s230 + $0x70] sm:$0xff]
        %v440 = vld [vmem:[%s230 + $0x78] sm:$0xff]
        %v441 = vld [vmem:[%s230 + $0x80] sm:$0xff]
        %v442 = vld [vmem:[%s230 + $0x88] sm:$0xff]
        %v443 = vld [vmem:[%s230 + $0x90] sm:$0xff]
        %v444 = vld [vmem:[%s230 + $0x98] sm:$0xff]
        %v445 = vld [vmem:[%s230 + $0xa0] sm:$0xff]
        %v446 = vld [vmem:[%s230 + $0xa8] sm:$0xff]
        %v447 = vld [vmem:[%s230 + $0xb0] sm:$0xff]
        %v448 = vld [vmem:[%s230 + $0xb8] sm:$0xff]
        %v449 = vld [vmem:[%s230 + $0xc0] sm:$0xff]
        %v450 = vld [vmem:[%s230 + $0xc8] sm:$0xff]
        %v451 = vld [vmem:[%s230 + $0xd0] sm:$0xff]
        %v452 = vld [vmem:[%s230 + $0xd8] sm:$0xff]
        %v453 = vld [vmem:[%s230 + $0xe0] sm:$0xff]
        %v454 = vld [vmem:[%s230 + $0xe8] sm:$0xff]
        %v455 = vld [vmem:[%s230 + $0xf0] sm:$0xff]
        %v456 = vld [vmem:[%s230 + $0xf8] sm:$0xff]
        %v457 = vld [vmem:[%s230 + $0x100] sm:$0xff]
        %v458 = vld [vmem:[%s230 + $0x108] sm:$0xff]
        %v459 = vld [vmem:[%s230 + $0x110] sm:$0xff]
        %v460 = vld [vmem:[%s230 + $0x118] sm:$0xff]
        %v461 = vld [vmem:[%s230 + $0x120] sm:$0xff]
        %v462 = vld [vmem:[%s230 + $0x128] sm:$0xff]
        %v463 = vld [vmem:[%s230 + $0x130] sm:$0xff]
        %v464 = vld [vmem:[%s230 + $0x138] sm:$0xff]
        %v465 = vld [vmem:[%s230 + $0x140] sm:$0xff]
        %v466 = vld [vmem:[%s230 + $0x148] sm:$0xff]
        %v467 = vld [vmem:[%s230 + $0x150] sm:$0xff]
        %v468 = vld [vmem:[%s230 + $0x158] sm:$0xff]
        %v469 = vld [vmem:[%s230 + $0x160] sm:$0xff]
        %v470 = vld [vmem:[%s230 + $0x168] sm:$0xff]
        %v471 = vld [vmem:[%s230 + $0x170] sm:$0xff]
        %v472 = vld [vmem:[%s230 + $0x178] sm:$0xff]
        %v473 = vld [vmem:[%s230 + $0x180] sm:$0xff]
        %v474 = vld [vmem:[%s230 + $0x188] sm:$0xff]
        %v475 = vld [vmem:[%s230 + $0x190] sm:$0xff]
        %v476 = vld [vmem:[%s230 + $0x198] sm:$0xff]
        %v477 = vld [vmem:[%s230 + $0x1a0] sm:$0xff]
        %v478 = vld [vmem:[%s230 + $0x1a8] sm:$0xff]
        %v479 = vld [vmem:[%s230 + $0x1b0] sm:$0xff]
        %v480 = vld [vmem:[%s230 + $0x1b8] sm:$0xff]
        %v481 = vld [vmem:[%s230 + $0x1c0] sm:$0xff]
        %v482 = vld [vmem:[%s230 + $0x1c8] sm:$0xff]
        %v483 = vld [vmem:[%s230 + $0x1d0] sm:$0xff]
        %v484 = vld [vmem:[%s230 + $0x1d8] sm:$0xff]
        %v485 = vld [vmem:[%s230 + $0x1e0] sm:$0xff]
        %v486 = vld [vmem:[%s230 + $0x1e8] sm:$0xff]
        %v487 = vld [vmem:[%s230 + $0x1f0] sm:$0xff]
        %v488 = vld [vmem:[%s230 + $0x1f8] sm:$0xff]
        %v553 = vunpack.c.l.b16 %v425
        %v554 = vunpack.c.h.b16 %v425
        %v555 = vunpack.c.l.b16 %v426
        %v556 = vunpack.c.h.b16 %v426
        %v557 = vunpack.c.l.b16 %v427
        %v558 = vunpack.c.h.b16 %v427
        %v559 = vunpack.c.l.b16 %v428
        %v560 = vunpack.c.h.b16 %v428
        %v561 = vunpack.c.l.b16 %v429
        %v562 = vunpack.c.h.b16 %v429
        %v563 = vunpack.c.l.b16 %v430
        %v564 = vunpack.c.h.b16 %v430
        %v565 = vunpack.c.l.b16 %v431
        %v566 = vunpack.c.h.b16 %v431
        %v567 = vunpack.c.l.b16 %v432
        %v568 = vunpack.c.h.b16 %v432
        %v569 = vunpack.c.l.b16 %v433
        %v570 = vunpack.c.h.b16 %v433
        %v571 = vunpack.c.l.b16 %v434
        %v572 = vunpack.c.h.b16 %v434
        %v573 = vunpack.c.l.b16 %v435
        %v574 = vunpack.c.h.b16 %v435
        %v575 = vunpack.c.l.b16 %v436
        %v576 = vunpack.c.h.b16 %v436
        %v577 = vunpack.c.l.b16 %v437
        %v578 = vunpack.c.h.b16 %v437
        %v579 = vunpack.c.l.b16 %v438
        %v580 = vunpack.c.h.b16 %v438
        %v581 = vunpack.c.l.b16 %v439
        %v582 = vunpack.c.h.b16 %v439
        %v583 = vunpack.c.l.b16 %v440
        %v584 = vunpack.c.h.b16 %v440
        %v585 = vunpack.c.l.b16 %v441
        %v586 = vunpack.c.h.b16 %v441
        %v587 = vunpack.c.l.b16 %v442
        %v588 = vunpack.c.h.b16 %v442
        %v589 = vunpack.c.l.b16 %v443
        %v590 = vunpack.c.h.b16 %v443
        %v591 = vunpack.c.l.b16 %v444
        %v592 = vunpack.c.h.b16 %v444
        %v593 = vunpack.c.l.b16 %v445
        %v594 = vunpack.c.h.b16 %v445
        %v595 = vunpack.c.l.b16 %v446
        %v596 = vunpack.c.h.b16 %v446
        %v597 = vunpack.c.l.b16 %v447
        %v598 = vunpack.c.h.b16 %v447
        %v599 = vunpack.c.l.b16 %v448
        %v600 = vunpack.c.h.b16 %v448
        %v601 = vunpack.c.l.b16 %v449
        %v602 = vunpack.c.h.b16 %v449
        %v603 = vunpack.c.l.b16 %v450
        %v604 = vunpack.c.h.b16 %v450
        %v605 = vunpack.c.l.b16 %v451
        %v606 = vunpack.c.h.b16 %v451
        %v607 = vunpack.c.l.b16 %v452
        %v608 = vunpack.c.h.b16 %v452
        %v609 = vunpack.c.l.b16 %v453
        %v610 = vunpack.c.h.b16 %v453
        %v611 = vunpack.c.l.b16 %v454
        %v612 = vunpack.c.h.b16 %v454
        %v613 = vunpack.c.l.b16 %v455
        %v614 = vunpack.c.h.b16 %v455
        %v615 = vunpack.c.l.b16 %v456
        %v616 = vunpack.c.h.b16 %v456
        %v617 = vunpack.c.l.b16 %v457
        %v618 = vunpack.c.h.b16 %v457
        %v619 = vunpack.c.l.b16 %v458
        %v620 = vunpack.c.h.b16 %v458
        %v621 = vunpack.c.l.b16 %v459
        %v622 = vunpack.c.h.b16 %v459
        %v623 = vunpack.c.l.b16 %v460
        %v624 = vunpack.c.h.b16 %v460
        %v625 = vunpack.c.l.b16 %v461
        %v626 = vunpack.c.h.b16 %v461
        %v627 = vunpack.c.l.b16 %v462
        %v628 = vunpack.c.h.b16 %v462
        %v629 = vunpack.c.l.b16 %v463
        %v630 = vunpack.c.h.b16 %v463
        %v631 = vunpack.c.l.b16 %v464
        %v632 = vunpack.c.h.b16 %v464
        %v633 = vunpack.c.l.b16 %v465
        %v634 = vunpack.c.h.b16 %v465
        %v635 = vunpack.c.l.b16 %v466
        %v636 = vunpack.c.h.b16 %v466
        %v637 = vunpack.c.l.b16 %v467
        %v638 = vunpack.c.h.b16 %v467
        %v639 = vunpack.c.l.b16 %v468
        %v640 = vunpack.c.h.b16 %v468
        %v641 = vunpack.c.l.b16 %v469
        %v642 = vunpack.c.h.b16 %v469
        %v643 = vunpack.c.l.b16 %v470
        %v644 = vunpack.c.h.b16 %v470
        %v645 = vunpack.c.l.b16 %v471
        %v646 = vunpack.c.h.b16 %v471
        %v647 = vunpack.c.l.b16 %v472
        %v648 = vunpack.c.h.b16 %v472
        %v649 = vunpack.c.l.b16 %v473
        %v650 = vunpack.c.h.b16 %v473
        %v651 = vunpack.c.l.b16 %v474
        %v652 = vunpack.c.h.b16 %v474
        %v653 = vunpack.c.l.b16 %v475
        %v654 = vunpack.c.h.b16 %v475
        %v655 = vunpack.c.l.b16 %v476
        %v656 = vunpack.c.h.b16 %v476
        %v657 = vunpack.c.l.b16 %v477
        %v658 = vunpack.c.h.b16 %v477
        %v659 = vunpack.c.l.b16 %v478
        %v660 = vunpack.c.h.b16 %v478
        %v661 = vunpack.c.l.b16 %v479
        %v662 = vunpack.c.h.b16 %v479
        %v663 = vunpack.c.l.b16 %v480
        %v664 = vunpack.c.h.b16 %v480
        %v665 = vunpack.c.l.b16 %v481
        %v666 = vunpack.c.h.b16 %v481
        %v667 = vunpack.c.l.b16 %v482
        %v668 = vunpack.c.h.b16 %v482
        %v669 = vunpack.c.l.b16 %v483
        %v670 = vunpack.c.h.b16 %v483
        %v671 = vunpack.c.l.b16 %v484
        %v672 = vunpack.c.h.b16 %v484
        %v673 = vunpack.c.l.b16 %v485
        %v674 = vunpack.c.h.b16 %v485
        %v675 = vunpack.c.l.b16 %v486
        %v676 = vunpack.c.h.b16 %v486
        %v677 = vunpack.c.l.b16 %v487
        %v678 = vunpack.c.h.b16 %v487
        %v679 = vunpack.c.l.b16 %v488
        %v680 = vunpack.c.h.b16 %v488
        %v681 = vpack.c.b16 %v557, %v553
        %v682 = vpack.c.b16 %v558, %v554
        %v683 = vpack.c.b16 %v559, %v555
        %v684 = vpack.c.b16 %v560, %v556
        %v685 = vpack.c.b16 %v565, %v561
        %v686 = vpack.c.b16 %v566, %v562
        %v687 = vpack.c.b16 %v567, %v563
        %v688 = vpack.c.b16 %v568, %v564
        %v689 = vpack.c.b16 %v573, %v569
        %v690 = vpack.c.b16 %v574, %v570
        %v691 = vpack.c.b16 %v575, %v571
        %v692 = vpack.c.b16 %v576, %v572
        %v693 = vpack.c.b16 %v581, %v577
        %v694 = vpack.c.b16 %v582, %v578
        %v695 = vpack.c.b16 %v583, %v579
        %v696 = vpack.c.b16 %v584, %v580
        %v697 = vpack.c.b16 %v589, %v585
        %v698 = vpack.c.b16 %v590, %v586
        %v699 = vpack.c.b16 %v591, %v587
        %v700 = vpack.c.b16 %v592, %v588
        %v701 = vpack.c.b16 %v597, %v593
        %v702 = vpack.c.b16 %v598, %v594
        %v703 = vpack.c.b16 %v599, %v595
        %v704 = vpack.c.b16 %v600, %v596
        %v705 = vpack.c.b16 %v605, %v601
        %v706 = vpack.c.b16 %v606, %v602
        %v707 = vpack.c.b16 %v607, %v603
        %v708 = vpack.c.b16 %v608, %v604
        %v709 = vpack.c.b16 %v613, %v609
        %v710 = vpack.c.b16 %v614, %v610
        %v711 = vpack.c.b16 %v615, %v611
        %v712 = vpack.c.b16 %v616, %v612
        %v713 = vpack.c.b16 %v621, %v617
        %v714 = vpack.c.b16 %v622, %v618
        %v715 = vpack.c.b16 %v623, %v619
        %v716 = vpack.c.b16 %v624, %v620
        %v717 = vpack.c.b16 %v629, %v625
        %v718 = vpack.c.b16 %v630, %v626
        %v719 = vpack.c.b16 %v631, %v627
        %v720 = vpack.c.b16 %v632, %v628
        %v721 = vpack.c.b16 %v637, %v633
        %v722 = vpack.c.b16 %v638, %v634
        %v723 = vpack.c.b16 %v639, %v635
        %v724 = vpack.c.b16 %v640, %v636
        %v725 = vpack.c.b16 %v645, %v641
        %v726 = vpack.c.b16 %v646, %v642
        %v727 = vpack.c.b16 %v647, %v643
        %v728 = vpack.c.b16 %v648, %v644
        %v729 = vpack.c.b16 %v653, %v649
        %v730 = vpack.c.b16 %v654, %v650
        %v731 = vpack.c.b16 %v655, %v651
        %v732 = vpack.c.b16 %v656, %v652
        %v733 = vpack.c.b16 %v661, %v657
        %v734 = vpack.c.b16 %v662, %v658
        %v735 = vpack.c.b16 %v663, %v659
        %v736 = vpack.c.b16 %v664, %v660
        %v737 = vpack.c.b16 %v669, %v665
        %v738 = vpack.c.b16 %v670, %v666
        %v739 = vpack.c.b16 %v671, %v667
        %v740 = vpack.c.b16 %v672, %v668
        %v741 = vpack.c.b16 %v677, %v673
        %v742 = vpack.c.b16 %v678, %v674
        %v743 = vpack.c.b16 %v679, %v675
        %v744 = vpack.c.b16 %v680, %v676
        %809 = vmatprep.subr.bf16.mxu0 0
        %810 = vmatpush1.bf16.msra.mxu0 %v361
        %811 = vmatprep.subr.bf16.mxu0 0
        %812 = vmatpush1.bf16.msra.mxu0 %v362
        %813 = vmatprep.subr.bf16.mxu0 0
        %814 = vmatpush1.bf16.msra.mxu0 %v363
        %815 = vmatprep.subr.bf16.mxu0 0
        %816 = vmatpush1.bf16.msra.mxu0 %v364
        %817 = vmatprep.subr.bf16.mxu0 0
        %818 = vmatpush1.bf16.msra.mxu0 %v365
        %819 = vmatprep.subr.bf16.mxu0 0
        %820 = vmatpush1.bf16.msra.mxu0 %v366
        %821 = vmatprep.subr.bf16.mxu0 0
        %822 = vmatpush1.bf16.msra.mxu0 %v367
        %823 = vmatprep.subr.bf16.mxu0 0
        %824 = vmatpush1.bf16.msra.mxu0 %v368
        %825 = vmatprep.subr.bf16.mxu0 0
        %826 = vmatpush1.bf16.msra.mxu0 %v369
        %827 = vmatprep.subr.bf16.mxu0 0
        %828 = vmatpush1.bf16.msra.mxu0 %v370
        %829 = vmatprep.subr.bf16.mxu0 0
        %830 = vmatpush1.bf16.msra.mxu0 %v371
        %831 = vmatprep.subr.bf16.mxu0 0
        %832 = vmatpush1.bf16.msra.mxu0 %v372
        %833 = vmatprep.subr.bf16.mxu0 0
        %834 = vmatpush1.bf16.msra.mxu0 %v373
        %835 = vmatprep.subr.bf16.mxu0 0
        %836 = vmatpush1.bf16.msra.mxu0 %v374
        %837 = vmatprep.subr.bf16.mxu0 0
        %838 = vmatpush1.bf16.msra.mxu0 %v375
        %839 = vmatprep.subr.bf16.mxu0 0
        %840 = vmatpush1.bf16.msra.mxu0 %v376
        %841 = vmatprep.mubr.bf16.mxu0 %v682
        %842 = vmatmul.mubr.bf16.gmra.mrb[0].mxu0 %v681
        %v843 = vpop.f32.mrb[0].mxu0
        %v844 = vadd.f32 0.0, %v843
        %v845 = vpop.f32.mrb[0].mxu0
        %v846 = vpop.f32.mrb[0].mxu0
        %v847 = vadd.f32 0.0, %v846
        %v848 = vpop.f32.mrb[0].mxu0
        %849 = vmatprep.mubr.bf16.mxu0 %v686
        %850 = vmatmul.mubr.bf16.gmra.mrb[0].mxu0 %v685
        %v851 = vpop.f32.mrb[0].mxu0
        %v852 = vadd.f32 0.0, %v851
        %v853 = vpop.f32.mrb[0].mxu0
        %v854 = vpop.f32.mrb[0].mxu0
        %v855 = vadd.f32 0.0, %v854
        %v856 = vpop.f32.mrb[0].mxu0
        %857 = vmatprep.mubr.bf16.mxu0 %v690
        %858 = vmatmul.mubr.bf16.gmra.mrb[0].mxu0 %v689
        %v859 = vpop.f32.mrb[0].mxu0
        %v860 = vadd.f32 0.0, %v859
        %v861 = vpop.f32.mrb[0].mxu0
        %v862 = vpop.f32.mrb[0].mxu0
        %v863 = vadd.f32 0.0, %v862
        %v864 = vpop.f32.mrb[0].mxu0
        %865 = vmatprep.mubr.bf16.mxu0 %v694
        %866 = vmatmul.mubr.bf16.gmra.mrb[0].mxu0 %v693
        %v867 = vpop.f32.mrb[0].mxu0
        %v868 = vadd.f32 0.0, %v867
        %v869 = vpop.f32.mrb[0].mxu0
        %v870 = vpop.f32.mrb[0].mxu0
        %v871 = vadd.f32 0.0, %v870
        %v872 = vpop.f32.mrb[0].mxu0
        %873 = vmatprep.mubr.bf16.mxu0 %v698
        %874 = vmatmul.mubr.bf16.gmra.mrb[0].mxu0 %v697
        %v875 = vpop.f32.mrb[0].mxu0
        %v876 = vadd.f32 0.0, %v875
        %v877 = vpop.f32.mrb[0].mxu0
        %v878 = vpop.f32.mrb[0].mxu0
        %v879 = vadd.f32 0.0, %v878
        %v880 = vpop.f32.mrb[0].mxu0
        %881 = vmatprep.mubr.bf16.mxu0 %v702
        %882 = vmatmul.mubr.bf16.gmra.mrb[0].mxu0 %v701
        %v883 = vpop.f32.mrb[0].mxu0
        %v884 = vadd.f32 0.0, %v883
        %v885 = vpop.f32.mrb[0].mxu0
        %v886 = vpop.f32.mrb[0].mxu0
        %v887 = vadd.f32 0.0, %v886
        %v888 = vpop.f32.mrb[0].mxu0
        %889 = vmatprep.mubr.bf16.mxu0 %v706
        %890 = vmatmul.mubr.bf16.gmra.mrb[0].mxu0 %v705
        %v891 = vpop.f32.mrb[0].mxu0
        %v892 = vadd.f32 0.0, %v891
        %v893 = vpop.f32.mrb[0].mxu0
        %v894 = vpop.f32.mrb[0].mxu0
        %v895 = vadd.f32 0.0, %v894
        %v896 = vpop.f32.mrb[0].mxu0
        %897 = vmatprep.mubr.bf16.mxu0 %v710
        %898 = vmatmul.mubr.bf16.gmra.mrb[0].mxu0 %v709
        %v899 = vpop.f32.mrb[0].mxu0
        %v900 = vadd.f32 0.0, %v899
        %v901 = vpop.f32.mrb[0].mxu0
        %v902 = vpop.f32.mrb[0].mxu0
        %v903 = vadd.f32 0.0, %v902
        %v904 = vpop.f32.mrb[0].mxu0
        %905 = vmatprep.mubr.bf16.mxu0 %v714
        %906 = vmatmul.mubr.bf16.gmra.mrb[0].mxu0 %v713
        %v907 = vpop.f32.mrb[0].mxu0
        %v908 = vadd.f32 0.0, %v907
        %v909 = vpop.f32.mrb[0].mxu0
        %v910 = vpop.f32.mrb[0].mxu0
        %v911 = vadd.f32 0.0, %v910
        %v912 = vpop.f32.mrb[0].mxu0
        %913 = vmatprep.mubr.bf16.mxu0 %v718
        %914 = vmatmul.mubr.bf16.gmra.mrb[0].mxu0 %v717
        %v915 = vpop.f32.mrb[0].mxu0
        %v916 = vadd.f32 0.0, %v915
        %v917 = vpop.f32.mrb[0].mxu0
        %v918 = vpop.f32.mrb[0].mxu0
        %v919 = vadd.f32 0.0, %v918
        %v920 = vpop.f32.mrb[0].mxu0
        %921 = vmatprep.mubr.bf16.mxu0 %v722
        %922 = vmatmul.mubr.bf16.gmra.mrb[0].mxu0 %v721
        %v923 = vpop.f32.mrb[0].mxu0
        %v924 = vadd.f32 0.0, %v923
        %v925 = vpop.f32.mrb[0].mxu0
        %v926 = vpop.f32.mrb[0].mxu0
        %v927 = vadd.f32 0.0, %v926
        %v928 = vpop.f32.mrb[0].mxu0
        %929 = vmatprep.mubr.bf16.mxu0 %v726
        %930 = vmatmul.mubr.bf16.gmra.mrb[0].mxu0 %v725
        %v931 = vpop.f32.mrb[0].mxu0
        %v932 = vadd.f32 0.0, %v931
        %v933 = vpop.f32.mrb[0].mxu0
        %v934 = vpop.f32.mrb[0].mxu0
        %v935 = vadd.f32 0.0, %v934
        %v936 = vpop.f32.mrb[0].mxu0
        %937 = vmatprep.mubr.bf16.mxu0 %v730
        %938 = vmatmul.mubr.bf16.gmra.mrb[0].mxu0 %v729
        %v939 = vpop.f32.mrb[0].mxu0
        %v940 = vadd.f32 0.0, %v939
        %v941 = vpop.f32.mrb[0].mxu0
        %v942 = vpop.f32.mrb[0].mxu0
        %v943 = vadd.f32 0.0, %v942
        %v944 = vpop.f32.mrb[0].mxu0
        %945 = vmatprep.mubr.bf16.mxu0 %v734
        %946 = vmatmul.mubr.bf16.gmra.mrb[0].mxu0 %v733
        %v947 = vpop.f32.mrb[0].mxu0
        %v948 = vadd.f32 0.0, %v947
        %v949 = vpop.f32.mrb[0].mxu0
        %v950 = vpop.f32.mrb[0].mxu0
        %v951 = vadd.f32 0.0, %v950
        %v952 = vpop.f32.mrb[0].mxu0
        %953 = vmatprep.mubr.bf16.mxu0 %v738
        %954 = vmatmul.mubr.bf16.gmra.mrb[0].mxu0 %v737
        %v955 = vpop.f32.mrb[0].mxu0
        %v956 = vadd.f32 0.0, %v955
        %v957 = vpop.f32.mrb[0].mxu0
        %v958 = vpop.f32.mrb[0].mxu0
        %v959 = vadd.f32 0.0, %v958
        %v960 = vpop.f32.mrb[0].mxu0
        %961 = vmatprep.mubr.bf16.mxu0 %v742
        %962 = vmatmul.mubr.bf16.gmra.mrb[0].mxu0 %v741
        %v963 = vpop.f32.mrb[0].mxu0
        %v964 = vadd.f32 0.0, %v963
        %v965 = vpop.f32.mrb[0].mxu0
        %v966 = vpop.f32.mrb[0].mxu0
        %v967 = vadd.f32 0.0, %v966
        %v968 = vpop.f32.mrb[0].mxu0
        %969 = vdwg.mxu0
        %970 = vmatprep.subr.bf16.mxu0 0
        %971 = vmatpush1.bf16.msra.mxu0 %v377
        %972 = vmatprep.subr.bf16.mxu0 0
        %973 = vmatpush1.bf16.msra.mxu0 %v378
        %974 = vmatprep.subr.bf16.mxu0 0
        %975 = vmatpush1.bf16.msra.mxu0 %v379
        %976 = vmatprep.subr.bf16.mxu0 0
        %977 = vmatpush1.bf16.msra.mxu0 %v380
        %978 = vmatprep.subr.bf16.mxu0 0
        %979 = vmatpush1.bf16.msra.mxu0 %v381
        %980 = vmatprep.subr.bf16.mxu0 0
        %981 = vmatpush1.bf16.msra.mxu0 %v382
        %982 = vmatprep.subr.bf16.mxu0 0
        %983 = vmatpush1.bf16.msra.mxu0 %v383
        %984 = vmatprep.subr.bf16.mxu0 0
        %985 = vmatpush1.bf16.msra.mxu0 %v384
        %986 = vmatprep.subr.bf16.mxu0 0
        %987 = vmatpush1.bf16.msra.mxu0 %v385
        %988 = vmatprep.subr.bf16.mxu0 0
        %989 = vmatpush1.bf16.msra.mxu0 %v386
        %990 = vmatprep.subr.bf16.mxu0 0
        %991 = vmatpush1.bf16.msra.mxu0 %v387
        %992 = vmatprep.subr.bf16.mxu0 0
        %993 = vmatpush1.bf16.msra.mxu0 %v388
        %994 = vmatprep.subr.bf16.mxu0 0
        %995 = vmatpush1.bf16.msra.mxu0 %v389
        %996 = vmatprep.subr.bf16.mxu0 0
        %997 = vmatpush1.bf16.msra.mxu0 %v390
        %998 = vmatprep.subr.bf16.mxu0 0
        %999 = vmatpush1.bf16.msra.mxu0 %v391
        %1000 = vmatprep.subr.bf16.mxu0 0
        %1001 = vmatpush1.bf16.msra.mxu0 %v392
        %1002 = vmatprep.mubr.bf16.mxu0 %v684
        %1003 = vmatmul.mubr.bf16.gmra.mrb[0].mxu0 %v683
        %v1004 = vpop.f32.mrb[0].mxu0
        %v1005 = vadd.f32 %v844, %v1004
        %v1006 = vpop.f32.mrb[0].mxu0
        %v1007 = vpop.f32.mrb[0].mxu0
        %v1008 = vadd.f32 %v847, %v1007
        %v1009 = vpop.f32.mrb[0].mxu0
        %1010 = vmatprep.mubr.bf16.mxu0 %v688
        %1011 = vmatmul.mubr.bf16.gmra.mrb[0].mxu0 %v687
        %v1012 = vpop.f32.mrb[0].mxu0
        %v1013 = vadd.f32 %v852, %v1012
        %v1014 = vpop.f32.mrb[0].mxu0
        %v1015 = vpop.f32.mrb[0].mxu0
        %v1016 = vadd.f32 %v855, %v1015
        %v1017 = vpop.f32.mrb[0].mxu0
        %1018 = vmatprep.mubr.bf16.mxu0 %v692
        %1019 = vmatmul.mubr.bf16.gmra.mrb[0].mxu0 %v691
        %v1020 = vpop.f32.mrb[0].mxu0
        %v1021 = vadd.f32 %v860, %v1020
        %v1022 = vpop.f32.mrb[0].mxu0
        %v1023 = vpop.f32.mrb[0].mxu0
        %v1024 = vadd.f32 %v863, %v1023
        %v1025 = vpop.f32.mrb[0].mxu0
        %1026 = vmatprep.mubr.bf16.mxu0 %v696
        %1027 = vmatmul.mubr.bf16.gmra.mrb[0].mxu0 %v695
        %v1028 = vpop.f32.mrb[0].mxu0
        %v1029 = vadd.f32 %v868, %v1028
        %v1030 = vpop.f32.mrb[0].mxu0
        %v1031 = vpop.f32.mrb[0].mxu0
        %v1032 = vadd.f32 %v871, %v1031
        %v1033 = vpop.f32.mrb[0].mxu0
        %1034 = vmatprep.mubr.bf16.mxu0 %v700
        %1035 = vmatmul.mubr.bf16.gmra.mrb[0].mxu0 %v699
        %v1036 = vpop.f32.mrb[0].mxu0
        %v1037 = vadd.f32 %v876, %v1036
        %v1038 = vpop.f32.mrb[0].mxu0
        %v1039 = vpop.f32.mrb[0].mxu0
        %v1040 = vadd.f32 %v879, %v1039
        %v1041 = vpop.f32.mrb[0].mxu0
        %1042 = vmatprep.mubr.bf16.mxu0 %v704
        %1043 = vmatmul.mubr.bf16.gmra.mrb[0].mxu0 %v703
        %v1044 = vpop.f32.mrb[0].mxu0
        %v1045 = vadd.f32 %v884, %v1044
        %v1046 = vpop.f32.mrb[0].mxu0
        %v1047 = vpop.f32.mrb[0].mxu0
        %v1048 = vadd.f32 %v887, %v1047
        %v1049 = vpop.f32.mrb[0].mxu0
        %1050 = vmatprep.mubr.bf16.mxu0 %v708
        %1051 = vmatmul.mubr.bf16.gmra.mrb[0].mxu0 %v707
        %v1052 = vpop.f32.mrb[0].mxu0
        %v1053 = vadd.f32 %v892, %v1052
        %v1054 = vpop.f32.mrb[0].mxu0
        %v1055 = vpop.f32.mrb[0].mxu0
        %v1056 = vadd.f32 %v895, %v1055
        %v1057 = vpop.f32.mrb[0].mxu0
        %1058 = vmatprep.mubr.bf16.mxu0 %v712
        %1059 = vmatmul.mubr.bf16.gmra.mrb[0].mxu0 %v711
        %v1060 = vpop.f32.mrb[0].mxu0
        %v1061 = vadd.f32 %v900, %v1060
        %v1062 = vpop.f32.mrb[0].mxu0
        %v1063 = vpop.f32.mrb[0].mxu0
        %v1064 = vadd.f32 %v903, %v1063
        %v1065 = vpop.f32.mrb[0].mxu0
        %1066 = vmatprep.mubr.bf16.mxu0 %v716
        %1067 = vmatmul.mubr.bf16.gmra.mrb[0].mxu0 %v715
        %v1068 = vpop.f32.mrb[0].mxu0
        %v1069 = vadd.f32 %v908, %v1068
        %v1070 = vpop.f32.mrb[0].mxu0
        %v1071 = vpop.f32.mrb[0].mxu0
        %v1072 = vadd.f32 %v911, %v1071
        %v1073 = vpop.f32.mrb[0].mxu0
        %1074 = vmatprep.mubr.bf16.mxu0 %v720
        %1075 = vmatmul.mubr.bf16.gmra.mrb[0].mxu0 %v719
        %v1076 = vpop.f32.mrb[0].mxu0
        %v1077 = vadd.f32 %v916, %v1076
        %v1078 = vpop.f32.mrb[0].mxu0
        %v1079 = vpop.f32.mrb[0].mxu0
        %v1080 = vadd.f32 %v919, %v1079
        %v1081 = vpop.f32.mrb[0].mxu0
        %1082 = vmatprep.mubr.bf16.mxu0 %v724
        %1083 = vmatmul.mubr.bf16.gmra.mrb[0].mxu0 %v723
        %v1084 = vpop.f32.mrb[0].mxu0
        %v1085 = vadd.f32 %v924, %v1084
        %v1086 = vpop.f32.mrb[0].mxu0
        %v1087 = vpop.f32.mrb[0].mxu0
        %v1088 = vadd.f32 %v927, %v1087
        %v1089 = vpop.f32.mrb[0].mxu0
        %1090 = vmatprep.mubr.bf16.mxu0 %v728
        %1091 = vmatmul.mubr.bf16.gmra.mrb[0].mxu0 %v727
        %v1092 = vpop.f32.mrb[0].mxu0
        %v1093 = vadd.f32 %v932, %v1092
        %v1094 = vpop.f32.mrb[0].mxu0
        %v1095 = vpop.f32.mrb[0].mxu0
        %v1096 = vadd.f32 %v935, %v1095
        %v1097 = vpop.f32.mrb[0].mxu0
        %1098 = vmatprep.mubr.bf16.mxu0 %v732
        %1099 = vmatmul.mubr.bf16.gmra.mrb[0].mxu0 %v731
        %v1100 = vpop.f32.mrb[0].mxu0
        %v1101 = vadd.f32 %v940, %v1100
        %v1102 = vpop.f32.mrb[0].mxu0
        %v1103 = vpop.f32.mrb[0].mxu0
        %v1104 = vadd.f32 %v943, %v1103
        %v1105 = vpop.f32.mrb[0].mxu0
        %1106 = vmatprep.mubr.bf16.mxu0 %v736
        %1107 = vmatmul.mubr.bf16.gmra.mrb[0].mxu0 %v735
        %v1108 = vpop.f32.mrb[0].mxu0
        %v1109 = vadd.f32 %v948, %v1108
        %v1110 = vpop.f32.mrb[0].mxu0
        %v1111 = vpop.f32.mrb[0].mxu0
        %v1112 = vadd.f32 %v951, %v1111
        %v1113 = vpop.f32.mrb[0].mxu0
        %1114 = vmatprep.mubr.bf16.mxu0 %v740
        %1115 = vmatmul.mubr.bf16.gmra.mrb[0].mxu0 %v739
        %v1116 = vpop.f32.mrb[0].mxu0
        %v1117 = vadd.f32 %v956, %v1116
        %v1118 = vpop.f32.mrb[0].mxu0
        %v1119 = vpop.f32.mrb[0].mxu0
        %v1120 = vadd.f32 %v959, %v1119
        %v1121 = vpop.f32.mrb[0].mxu0
        %1122 = vmatprep.mubr.bf16.mxu0 %v744
        %1123 = vmatmul.mubr.bf16.gmra.mrb[0].mxu0 %v743
        %v1124 = vpop.f32.mrb[0].mxu0
        %v1125 = vadd.f32 %v964, %v1124
        %v1126 = vpop.f32.mrb[0].mxu0
        %v1127 = vpop.f32.mrb[0].mxu0
        %v1128 = vadd.f32 %v967, %v1127
        %v1129 = vpop.f32.mrb[0].mxu0
        %1130 = vdwg.mxu0
        %v1131 = vadd.f32 %v393, %v1005
        %v1132 = vadd.f32 %v394, %v1008
        %v1133 = vadd.f32 %v395, %v1013
        %v1134 = vadd.f32 %v396, %v1016
        %v1135 = vadd.f32 %v397, %v1021
        %v1136 = vadd.f32 %v398, %v1024
        %v1137 = vadd.f32 %v399, %v1029
        %v1138 = vadd.f32 %v400, %v1032
        %v1139 = vadd.f32 %v401, %v1037
        %v1140 = vadd.f32 %v402, %v1040
        %v1141 = vadd.f32 %v403, %v1045
        %v1142 = vadd.f32 %v404, %v1048
        %v1143 = vadd.f32 %v405, %v1053
        %v1144 = vadd.f32 %v406, %v1056
        %v1145 = vadd.f32 %v407, %v1061
        %v1146 = vadd.f32 %v408, %v1064
        %v1147 = vadd.f32 %v409, %v1069
        %v1148 = vadd.f32 %v410, %v1072
        %v1149 = vadd.f32 %v411, %v1077
        %v1150 = vadd.f32 %v412, %v1080
        %v1151 = vadd.f32 %v413, %v1085
        %v1152 = vadd.f32 %v414, %v1088
        %v1153 = vadd.f32 %v415, %v1093
        %v1154 = vadd.f32 %v416, %v1096
        %v1155 = vadd.f32 %v417, %v1101
        %v1156 = vadd.f32 %v418, %v1104
        %v1157 = vadd.f32 %v419, %v1109
        %v1158 = vadd.f32 %v420, %v1112
        %v1159 = vadd.f32 %v421, %v1117
        %v1160 = vadd.f32 %v422, %v1120
        %v1161 = vadd.f32 %v423, %v1125
        %v1162 = vadd.f32 %v424, %v1128
        %1163 = vst [vmem:[#allocation2] sm:$0xff] %v1131
        %1164 = vst [vmem:[#allocation2 + $0x8] sm:$0xff] %v1132
        %1165 = vst [vmem:[#allocation2 + $0x10] sm:$0xff] %v1133
        %1166 = vst [vmem:[#allocation2 + $0x18] sm:$0xff] %v1134
        %1167 = vst [vmem:[#allocation2 + $0x20] sm:$0xff] %v1135
        %1168 = vst [vmem:[#allocation2 + $0x28] sm:$0xff] %v1136
        %1169 = vst [vmem:[#allocation2 + $0x30] sm:$0xff] %v1137
        %1170 = vst [vmem:[#allocation2 + $0x38] sm:$0xff] %v1138
        %1171 = vst [vmem:[#allocation2 + $0x40] sm:$0xff] %v1139
        %1172 = vst [vmem:[#allocation2 + $0x48] sm:$0xff] %v1140
        %1173 = vst [vmem:[#allocation2 + $0x50] sm:$0xff] %v1141
        %1174 = vst [vmem:[#allocation2 + $0x58] sm:$0xff] %v1142
        %1175 = vst [vmem:[#allocation2 + $0x60] sm:$0xff] %v1143
        %1176 = vst [vmem:[#allocation2 + $0x68] sm:$0xff] %v1144
        %1177 = vst [vmem:[#allocation2 + $0x70] sm:$0xff] %v1145
        %1178 = vst [vmem:[#allocation2 + $0x78] sm:$0xff] %v1146
        %1179 = vst [vmem:[#allocation2 + $0x80] sm:$0xff] %v1147
        %1180 = vst [vmem:[#allocation2 + $0x88] sm:$0xff] %v1148
        %1181 = vst [vmem:[#allocation2 + $0x90] sm:$0xff] %v1149
        %1182 = vst [vmem:[#allocation2 + $0x98] sm:$0xff] %v1150
        %1183 = vst [vmem:[#allocation2 + $0xa0] sm:$0xff] %v1151
        %1184 = vst [vmem:[#allocation2 + $0xa8] sm:$0xff] %v1152
        %1185 = vst [vmem:[#allocation2 + $0xb0] sm:$0xff] %v1153
        %1186 = vst [vmem:[#allocation2 + $0xb8] sm:$0xff] %v1154
        %1187 = vst [vmem:[#allocation2 + $0xc0] sm:$0xff] %v1155
        %1188 = vst [vmem:[#allocation2 + $0xc8] sm:$0xff] %v1156
        %1189 = vst [vmem:[#allocation2 + $0xd0] sm:$0xff] %v1157
        %1190 = vst [vmem:[#allocation2 + $0xd8] sm:$0xff] %v1158
        %1191 = vst [vmem:[#allocation2 + $0xe0] sm:$0xff] %v1159
        %1192 = vst [vmem:[#allocation2 + $0xe8] sm:$0xff] %v1160
        %1193 = vst [vmem:[#allocation2 + $0xf0] sm:$0xff] %v1161
        %1194 = vst [vmem:[#allocation2 + $0xf8] sm:$0xff] %v1162
        %p1195 = scmp.eq.s32.totalorder %s30, 3
        // Predicated region
        $region45: #{tpu_custom_call.1} parent=31 // pred_check
          %p1196 = pneg %p1195
        $region46: #{tpu_custom_call.1} parent=31 // pred_check_branch
          %1198 = sbr.rel (%p1196) target = $region48
        $region47: #{tpu_custom_call.1} parent=31 // pred_region
          %v1199 = vld [vmem:[#allocation2] sm:$0xff]
          %v1200 = vld [vmem:[#allocation2 + $0x8] sm:$0xff]
          %v1201 = vld [vmem:[#allocation2 + $0x10] sm:$0xff]
          %v1202 = vld [vmem:[#allocation2 + $0x18] sm:$0xff]
          %v1203 = vld [vmem:[#allocation2 + $0x20] sm:$0xff]
          %v1204 = vld [vmem:[#allocation2 + $0x28] sm:$0xff]
          %v1205 = vld [vmem:[#allocation2 + $0x30] sm:$0xff]
          %v1206 = vld [vmem:[#allocation2 + $0x38] sm:$0xff]
          %v1207 = vld [vmem:[#allocation2 + $0x40] sm:$0xff]
          %v1208 = vld [vmem:[#allocation2 + $0x48] sm:$0xff]
          %v1209 = vld [vmem:[#allocation2 + $0x50] sm:$0xff]
          %v1210 = vld [vmem:[#allocation2 + $0x58] sm:$0xff]
          %v1211 = vld [vmem:[#allocation2 + $0x60] sm:$0xff]
          %v1212 = vld [vmem:[#allocation2 + $0x68] sm:$0xff]
          %v1213 = vld [vmem:[#allocation2 + $0x70] sm:$0xff]
          %v1214 = vld [vmem:[#allocation2 + $0x78] sm:$0xff]
          %v1215 = vld [vmem:[#allocation2 + $0x80] sm:$0xff]
          %v1216 = vld [vmem:[#allocation2 + $0x88] sm:$0xff]
          %v1217 = vld [vmem:[#allocation2 + $0x90] sm:$0xff]
          %v1218 = vld [vmem:[#allocation2 + $0x98] sm:$0xff]
          %v1219 = vld [vmem:[#allocation2 + $0xa0] sm:$0xff]
          %v1220 = vld [vmem:[#allocation2 + $0xa8] sm:$0xff]
          %v1221 = vld [vmem:[#allocation2 + $0xb0] sm:$0xff]
          %v1222 = vld [vmem:[#allocation2 + $0xb8] sm:$0xff]
          %v1223 = vld [vmem:[#allocation2 + $0xc0] sm:$0xff]
          %v1224 = vld [vmem:[#allocation2 + $0xc8] sm:$0xff]
          %v1225 = vld [vmem:[#allocation2 + $0xd0] sm:$0xff]
          %v1226 = vld [vmem:[#allocation2 + $0xd8] sm:$0xff]
          %v1227 = vld [vmem:[#allocation2 + $0xe0] sm:$0xff]
          %v1228 = vld [vmem:[#allocation2 + $0xe8] sm:$0xff]
          %v1229 = vld [vmem:[#allocation2 + $0xf0] sm:$0xff]
          %v1230 = vld [vmem:[#allocation2 + $0xf8] sm:$0xff]
          %v1231 = vld [vmem:[%s2] sm:$0xff]
          %v1232 = vld [vmem:[%s2 + $0x8] sm:$0xff]
          %v1233 = vld [vmem:[%s2 + $0x10] sm:$0xff]
          %v1234 = vld [vmem:[%s2 + $0x18] sm:$0xff]
          %v1235 = vld [vmem:[%s2 + $0x20] sm:$0xff]
          %v1236 = vld [vmem:[%s2 + $0x28] sm:$0xff]
          %v1237 = vld [vmem:[%s2 + $0x30] sm:$0xff]
          %v1238 = vld [vmem:[%s2 + $0x38] sm:$0xff]
          %v1239 = vld [vmem:[%s2 + $0x40] sm:$0xff]
          %v1240 = vld [vmem:[%s2 + $0x48] sm:$0xff]
          %v1241 = vld [vmem:[%s2 + $0x50] sm:$0xff]
          %v1242 = vld [vmem:[%s2 + $0x58] sm:$0xff]
          %v1243 = vld [vmem:[%s2 + $0x60] sm:$0xff]
          %v1244 = vld [vmem:[%s2 + $0x68] sm:$0xff]
          %v1245 = vld [vmem:[%s2 + $0x70] sm:$0xff]
          %v1246 = vld [vmem:[%s2 + $0x78] sm:$0xff]
          %v1247 = vld [vmem:[%s2 + $0x80] sm:$0xff]
          %v1248 = vld [vmem:[%s2 + $0x88] sm:$0xff]
          %v1249 = vld [vmem:[%s2 + $0x90] sm:$0xff]
          %v1250 = vld [vmem:[%s2 + $0x98] sm:$0xff]
          %v1251 = vld [vmem:[%s2 + $0xa0] sm:$0xff]
          %v1252 = vld [vmem:[%s2 + $0xa8] sm:$0xff]
          %v1253 = vld [vmem:[%s2 + $0xb0] sm:$0xff]
          %v1254 = vld [vmem:[%s2 + $0xb8] sm:$0xff]
          %v1255 = vld [vmem:[%s2 + $0xc0] sm:$0xff]
          %v1256 = vld [vmem:[%s2 + $0xc8] sm:$0xff]
          %v1257 = vld [vmem:[%s2 + $0xd0] sm:$0xff]
          %v1258 = vld [vmem:[%s2 + $0xd8] sm:$0xff]
          %v1259 = vld [vmem:[%s2 + $0xe0] sm:$0xff]
          %v1260 = vld [vmem:[%s2 + $0xe8] sm:$0xff]
          %v1261 = vld [vmem:[%s2 + $0xf0] sm:$0xff]
          %v1262 = vld [vmem:[%s2 + $0xf8] sm:$0xff]
          %1264 = vset.pattern.permute.xlu0 0
          %1265 = vperm.xlu0 %1264, %v1231
          %v1266 = vpop.permute.xlu0 %1265
          %1269 = vset.pattern.permute.xlu0 0
          %1270 = vperm.xlu0 %1269, %v1232
          %v1271 = vpop.permute.xlu0 %1270
          %1274 = vset.pattern.permute.xlu0 0
          %1275 = vperm.xlu0 %1274, %v1233
          %v1276 = vpop.permute.xlu0 %1275
          %1279 = vset.pattern.permute.xlu0 0
          %1280 = vperm.xlu0 %1279, %v1234
          %v1281 = vpop.permute.xlu0 %1280
          %1284 = vset.pattern.permute.xlu0 0
          %1285 = vperm.xlu0 %1284, %v1235
          %v1286 = vpop.permute.xlu0 %1285
          %1289 = vset.pattern.permute.xlu0 0
          %1290 = vperm.xlu0 %1289, %v1236
          %v1291 = vpop.permute.xlu0 %1290
          %1294 = vset.pattern.permute.xlu0 0
          %1295 = vperm.xlu0 %1294, %v1237
          %v1296 = vpop.permute.xlu0 %1295
          %1299 = vset.pattern.permute.xlu0 0
          %1300 = vperm.xlu0 %1299, %v1238
          %v1301 = vpop.permute.xlu0 %1300
          %1304 = vset.pattern.permute.xlu0 0
          %1305 = vperm.xlu0 %1304, %v1239
          %v1306 = vpop.permute.xlu0 %1305
          %1309 = vset.pattern.permute.xlu0 0
          %1310 = vperm.xlu0 %1309, %v1240
          %v1311 = vpop.permute.xlu0 %1310
          %1314 = vset.pattern.permute.xlu0 0
          %1315 = vperm.xlu0 %1314, %v1241
          %v1316 = vpop.permute.xlu0 %1315
          %1319 = vset.pattern.permute.xlu0 0
          %1320 = vperm.xlu0 %1319, %v1242
          %v1321 = vpop.permute.xlu0 %1320
          %1324 = vset.pattern.permute.xlu0 0
          %1325 = vperm.xlu0 %1324, %v1243
          %v1326 = vpop.permute.xlu0 %1325
          %1329 = vset.pattern.permute.xlu0 0
          %1330 = vperm.xlu0 %1329, %v1244
          %v1331 = vpop.permute.xlu0 %1330
          %1334 = vset.pattern.permute.xlu0 0
          %1335 = vperm.xlu0 %1334, %v1245
          %v1336 = vpop.permute.xlu0 %1335
          %1339 = vset.pattern.permute.xlu0 0
          %1340 = vperm.xlu0 %1339, %v1246
          %v1341 = vpop.permute.xlu0 %1340
          %1344 = vset.pattern.permute.xlu0 0
          %1345 = vperm.xlu0 %1344, %v1247
          %v1346 = vpop.permute.xlu0 %1345
          %1349 = vset.pattern.permute.xlu0 0
          %1350 = vperm.xlu0 %1349, %v1248
          %v1351 = vpop.permute.xlu0 %1350
          %1354 = vset.pattern.permute.xlu0 0
          %1355 = vperm.xlu0 %1354, %v1249
          %v1356 = vpop.permute.xlu0 %1355
          %1359 = vset.pattern.permute.xlu0 0
          %1360 = vperm.xlu0 %1359, %v1250
          %v1361 = vpop.permute.xlu0 %1360
          %1364 = vset.pattern.permute.xlu0 0
          %1365 = vperm.xlu0 %1364, %v1251
          %v1366 = vpop.permute.xlu0 %1365
          %1369 = vset.pattern.permute.xlu0 0
          %1370 = vperm.xlu0 %1369, %v1252
          %v1371 = vpop.permute.xlu0 %1370
          %1374 = vset.pattern.permute.xlu0 0
          %1375 = vperm.xlu0 %1374, %v1253
          %v1376 = vpop.permute.xlu0 %1375
          %1379 = vset.pattern.permute.xlu0 0
          %1380 = vperm.xlu0 %1379, %v1254
          %v1381 = vpop.permute.xlu0 %1380
          %1384 = vset.pattern.permute.xlu0 0
          %1385 = vperm.xlu0 %1384, %v1255
          %v1386 = vpop.permute.xlu0 %1385
          %1389 = vset.pattern.permute.xlu0 0
          %1390 = vperm.xlu0 %1389, %v1256
          %v1391 = vpop.permute.xlu0 %1390
          %1394 = vset.pattern.permute.xlu0 0
          %1395 = vperm.xlu0 %1394, %v1257
          %v1396 = vpop.permute.xlu0 %1395
          %1399 = vset.pattern.permute.xlu0 0
          %1400 = vperm.xlu0 %1399, %v1258
          %v1401 = vpop.permute.xlu0 %1400
          %1404 = vset.pattern.permute.xlu0 0
          %1405 = vperm.xlu0 %1404, %v1259
          %v1406 = vpop.permute.xlu0 %1405
          %1409 = vset.pattern.permute.xlu0 0
          %1410 = vperm.xlu0 %1409, %v1260
          %v1411 = vpop.permute.xlu0 %1410
          %1414 = vset.pattern.permute.xlu0 0
          %1415 = vperm.xlu0 %1414, %v1261
          %v1416 = vpop.permute.xlu0 %1415
          %1419 = vset.pattern.permute.xlu0 0
          %1420 = vperm.xlu0 %1419, %v1262
          %v1421 = vpop.permute.xlu0 %1420
          %v1423 = vadd.f32 %v1199, %v1266
          %v1424 = vadd.f32 %v1200, %v1271
          %v1425 = vadd.f32 %v1201, %v1276
          %v1426 = vadd.f32 %v1202, %v1281
          %v1427 = vadd.f32 %v1203, %v1286
          %v1428 = vadd.f32 %v1204, %v1291
          %v1429 = vadd.f32 %v1205, %v1296
          %v1430 = vadd.f32 %v1206, %v1301
          %v1431 = vadd.f32 %v1207, %v1306
          %v1432 = vadd.f32 %v1208, %v1311
          %v1433 = vadd.f32 %v1209, %v1316
          %v1434 = vadd.f32 %v1210, %v1321
          %v1435 = vadd.f32 %v1211, %v1326
          %v1436 = vadd.f32 %v1212, %v1331
          %v1437 = vadd.f32 %v1213, %v1336
          %v1438 = vadd.f32 %v1214, %v1341
          %v1439 = vadd.f32 %v1215, %v1346
          %v1440 = vadd.f32 %v1216, %v1351
          %v1441 = vadd.f32 %v1217, %v1356
          %v1442 = vadd.f32 %v1218, %v1361
          %v1443 = vadd.f32 %v1219, %v1366
          %v1444 = vadd.f32 %v1220, %v1371
          %v1445 = vadd.f32 %v1221, %v1376
          %v1446 = vadd.f32 %v1222, %v1381
          %v1447 = vadd.f32 %v1223, %v1386
          %v1448 = vadd.f32 %v1224, %v1391
          %v1449 = vadd.f32 %v1225, %v1396
          %v1450 = vadd.f32 %v1226, %v1401
          %v1451 = vadd.f32 %v1227, %v1406
          %v1452 = vadd.f32 %v1228, %v1411
          %v1453 = vadd.f32 %v1229, %v1416
          %v1454 = vadd.f32 %v1230, %v1421
          %v1455 = vmax.f32 %v1423, 0.0
          %v1456 = vmax.f32 %v1424, 0.0
          %v1457 = vmax.f32 %v1425, 0.0
          %v1458 = vmax.f32 %v1426, 0.0
          %v1459 = vmax.f32 %v1427, 0.0
          %v1460 = vmax.f32 %v1428, 0.0
          %v1461 = vmax.f32 %v1429, 0.0
          %v1462 = vmax.f32 %v1430, 0.0
          %v1463 = vmax.f32 %v1431, 0.0
          %v1464 = vmax.f32 %v1432, 0.0
          %v1465 = vmax.f32 %v1433, 0.0
          %v1466 = vmax.f32 %v1434, 0.0
          %v1467 = vmax.f32 %v1435, 0.0
          %v1468 = vmax.f32 %v1436, 0.0
          %v1469 = vmax.f32 %v1437, 0.0
          %v1470 = vmax.f32 %v1438, 0.0
          %v1471 = vmax.f32 %v1439, 0.0
          %v1472 = vmax.f32 %v1440, 0.0
          %v1473 = vmax.f32 %v1441, 0.0
          %v1474 = vmax.f32 %v1442, 0.0
          %v1475 = vmax.f32 %v1443, 0.0
          %v1476 = vmax.f32 %v1444, 0.0
          %v1477 = vmax.f32 %v1445, 0.0
          %v1478 = vmax.f32 %v1446, 0.0
          %v1479 = vmax.f32 %v1447, 0.0
          %v1480 = vmax.f32 %v1448, 0.0
          %v1481 = vmax.f32 %v1449, 0.0
          %v1482 = vmax.f32 %v1450, 0.0
          %v1483 = vmax.f32 %v1451, 0.0
          %v1484 = vmax.f32 %v1452, 0.0
          %v1485 = vmax.f32 %v1453, 0.0
          %v1486 = vmax.f32 %v1454, 0.0
          %1487 = vst [vmem:[%s257] sm:$0xff] %v1455
          %1488 = vst [vmem:[%s257 + $0x8] sm:$0xff] %v1456
          %1489 = vst [vmem:[%s257 + $0x10] sm:$0xff] %v1457
          %1490 = vst [vmem:[%s257 + $0x18] sm:$0xff] %v1458
          %1491 = vst [vmem:[%s257 + $0x20] sm:$0xff] %v1459
          %1492 = vst [vmem:[%s257 + $0x28] sm:$0xff] %v1460
          %1493 = vst [vmem:[%s257 + $0x30] sm:$0xff] %v1461
          %1494 = vst [vmem:[%s257 + $0x38] sm:$0xff] %v1462
          %1495 = vst [vmem:[%s257 + $0x40] sm:$0xff] %v1463
          %1496 = vst [vmem:[%s257 + $0x48] sm:$0xff] %v1464
          %1497 = vst [vmem:[%s257 + $0x50] sm:$0xff] %v1465
          %1498 = vst [vmem:[%s257 + $0x58] sm:$0xff] %v1466
          %1499 = vst [vmem:[%s257 + $0x60] sm:$0xff] %v1467
          %1500 = vst [vmem:[%s257 + $0x68] sm:$0xff] %v1468
          %1501 = vst [vmem:[%s257 + $0x70] sm:$0xff] %v1469
          %1502 = vst [vmem:[%s257 + $0x78] sm:$0xff] %v1470
          %1503 = vst [vmem:[%s257 + $0x80] sm:$0xff] %v1471
          %1504 = vst [vmem:[%s257 + $0x88] sm:$0xff] %v1472
          %1505 = vst [vmem:[%s257 + $0x90] sm:$0xff] %v1473
          %1506 = vst [vmem:[%s257 + $0x98] sm:$0xff] %v1474
          %1507 = vst [vmem:[%s257 + $0xa0] sm:$0xff] %v1475
          %1508 = vst [vmem:[%s257 + $0xa8] sm:$0xff] %v1476
          %1509 = vst [vmem:[%s257 + $0xb0] sm:$0xff] %v1477
          %1510 = vst [vmem:[%s257 + $0xb8] sm:$0xff] %v1478
          %1511 = vst [vmem:[%s257 + $0xc0] sm:$0xff] %v1479
          %1512 = vst [vmem:[%s257 + $0xc8] sm:$0xff] %v1480
          %1513 = vst [vmem:[%s257 + $0xd0] sm:$0xff] %v1481
          %1514 = vst [vmem:[%s257 + $0xd8] sm:$0xff] %v1482
          %1515 = vst [vmem:[%s257 + $0xe0] sm:$0xff] %v1483
          %1516 = vst [vmem:[%s257 + $0xe8] sm:$0xff] %v1484
          %1517 = vst [vmem:[%s257 + $0xf0] sm:$0xff] %v1485
          %1518 = vst [vmem:[%s257 + $0xf8] sm:$0xff] %v1486
        $region48: #{tpu_custom_call.1} parent=31 // pred_fallthru
          _
        %s1519 = sand.u32 %s129, 1
        %s1520 = scalar_lea.sflag [#allocation5], %s1519
        %s1521 = sand.u32 %s129, 1
        %s1522 = smul.addr %s1521, 256
        %s1523 = scalar_lea.vmem [#allocation8], %s1522
        // Predicated region
        $region49: #{tpu_custom_call.1} parent=31 // pred_check
          %p1524 = pneg %p139
        $region50: #{tpu_custom_call.1} parent=31 // pred_check_branch
          %1526 = sbr.rel (%p1524) target = $region52
        $region51: #{tpu_custom_call.1} parent=31 // pred_region
          %s1528 = ssub.s32 4096, 4096
          %1529 = vsyncadd %s1520, %s1528
          %s1530 = smul.addr %s28, 64
          %s1531 = sadd.s32 %s29, %s1530
          %s1532 = smul.addr %s1531, 128
          %s1533 = scalar_lea.hbm %s3, %s1532
          %s1534 = sshll.u32 %s1523, 4
          %s1535 = int_to_ptr.vmem [resolvable:$true] %s1534
          %1540 = dma.vmem_to_hbm [thread:$0]  %s1535, 4096, %s1533, %s1520, 128, 256, 8
        $region52: #{tpu_custom_call.1} parent=31 // pred_fallthru
          _
      $region32: #{tpu_custom_call.1} parent=5 // pred_fallthru
        _
      %p1541 = scmp.le.s32.totalorder 2, %s18
      // Predicated region
      $region53: #{tpu_custom_call.1} parent=5 // pred_check
        %p1542 = pneg %p1541
      $region54: #{tpu_custom_call.1} parent=5 // pred_check_branch
        %1544 = sbr.rel (%p1542) target = $region56
      $region55: #{tpu_custom_call.1} parent=5 // pred_region
        %s1545 = ssub.s32 %s18, 2
        // Predicated region
        $region57: #{tpu_custom_call.1} parent=55 // pred_check
          %p1546 = pneg %p145
        $region58: #{tpu_custom_call.1} parent=55 // pred_check_branch
          %1548 = sbr.rel (%p1546) target = $region60
        $region59: #{tpu_custom_call.1} parent=55 // pred_region
          %s1549 = sand.u32 %s130, 1
          %s1550 = scalar_lea.sflag [#allocation5], %s1549
          %s1551 = sand.u32 %s130, 1
          %s1552 = smul.addr %s1551, 256
          %s1553 = scalar_lea.vmem [#allocation8], %s1552
          %1554 = dma.done %s1550, 4096
        $region60: #{tpu_custom_call.1} parent=55 // pred_fallthru
          _
      $region56: #{tpu_custom_call.1} parent=5 // pred_fallthru
        _
    $region6: #{tpu_custom_call.1} parent=1 // loop_footer
      %s22 = sadd.s32 1, %s18
    $region7: #{tpu_custom_call.1} parent=1 // loop_footer_branch
      %17 = sbr.rel target = $region3
    $region8: #{tpu_custom_call.1} parent=1 // loop_exit
      _
    %1555 = vsyncpa [#allocation4], 1
    %s1556 = scalar_lea.sflag [#allocation4], 1
    %1557 = vsyncpa %s1556, 1
    %1558 = vsyncpa [#allocation7], 1
    %s1559 = scalar_lea.sflag [#allocation7], 1
    %1560 = vsyncpa %s1559, 1
    %1561 = vsyncpa [#allocation5], 1
    %s1562 = scalar_lea.sflag [#allocation5], 1
    %1563 = vsyncpa %s1562, 1

</llo_original>
